<compile_context>
chip_gen: v6e
topology: v6e:2x2x1
jax: 0.10.0
libtpu: 0.0.40
codegen_flags: <defaults>
</compile_context>

<pallas_src>
import functools

import jax
import jax.numpy as jnp
from jax.experimental import pallas as pl
from jax.experimental.pallas import tpu as pltpu

# ---------------- configuration (small, consistent with the module) ----------
H = 32                       # cmd_args.hidden_dim
VAR_NUM = 8                  # cmd_args.max_var_num

CHOICES = {
    "color":    ["red", "green", "blue", "cyan"],
    "size":     ["small", "large"],
    "material": ["rubber", "metal"],
    "shape":    ["cube", "sphere", "cylinder"],
}
OPERATION_LIST = ["left", "right", "front", "behind"] + list(CHOICES.keys())
N_RELATIONS = 4
AVAILABLE_OBJ_DICT = {str(i): [j for j in range(VAR_NUM) if j != i]
                      for i in range(VAR_NUM)}

OP_N = len(OPERATION_LIST)                                      # 8
S3_WIDTHS = [VAR_NUM - 1] + [len(v) for v in CHOICES.values()]  # [7, 4, 2, 2, 3]
N_S3_HEADS = len(S3_WIDTHS)                                     # 5
VOCAB_PAD = 16                                                  # 0..7 ops, 8..15 vars
VAR_TOK_BASE = OP_N
OUT_LANES = 128

# ---------------- packed weight-slab layout (rows x 128 lanes, f32) ----------
# Each head block is (32, 128): lanes [0:32]=W1, [32:64]=W2, [64:64+out]=W3 (zero pad).
ROW_OP_W   = 0                       # operation head weights
ROW_O1_W   = 32                      # object-1 head weights
ROW_S3_W   = 64                      # 5 stage-3 heads, 32 rows each -> 64..224
ROW_GRU_WH = 224                     # GRU hidden weights (H, 3H) in lanes 0:96
ROW_VWI    = 256                     # folded (vocab @ Wi + bi) (16, 3H) in lanes 0:96
ROW_BIAS   = 272                     # 8 bias rows:
#   row 0: op  b1|b2|b3   row 1: o1 b1|b2|b3   rows 2..6: s3 head biases
#   row 7: GRU bh_cat in lanes 0:96
TOTAL_ROWS = 280


# ---------------- in-kernel helpers ------------------------------------------
def _head_mlp(x, blk, brow):
    """Linear->ReLU->Linear->ReLU->Linear over a packed (H,128) weight block."""
    w1, b1 = blk[:, 0:H],       brow[:, 0:H]
    w2, b2 = blk[:, H:2 * H],   brow[:, H:2 * H]
    w3, b3 = blk[:, 2 * H:3 * H], brow[:, 2 * H:3 * H]
    h1 = jnp.maximum(jnp.dot(x, w1, preferred_element_type=jnp.float32) + b1, 0.0)
    h2 = jnp.maximum(jnp.dot(h1, w2, preferred_element_type=jnp.float32) + b2, 0.0)
    return jnp.dot(h2, w3, preferred_element_type=jnp.float32) + b3      # (1, 32)


def _softmax_eps_argmax(logits, n_valid_f, eps):
    """Masked softmax + eps-mix + argmax + gather of the selected probability.

    Matches GlobalDecoder2.get_prob with test_type == 'max' (exact reciprocal)."""
    width = logits.shape[1]
    lane = jax.lax.broadcasted_iota(jnp.int32, logits.shape, 1)
    mask = lane.astype(jnp.float32) < n_valid_f
    neg = jnp.where(mask, logits, -1e30)
    m = jnp.max(neg, axis=1, keepdims=True)
    e = jnp.where(mask, jnp.exp(neg - m), 0.0)
    s = jnp.sum(e, axis=1, keepdims=True)
    probs = e / s                                            # exact softmax
    # probs = probs*(1-eps) + eps/probs.shape[1] over the real (unpadded) width
    probs = jnp.where(mask, probs * (1.0 - eps) + eps / n_valid_f, 0.0)
    mx = jnp.max(probs, axis=1, keepdims=True)
    sel = jnp.min(jnp.where(probs >= mx, lane, width), axis=1, keepdims=True)
    p_sel = jnp.sum(jnp.where(lane == sel, probs, 0.0), axis=1, keepdims=True)
    return sel, p_sel                                        # (1,1) i32, (1,1) f32


def _gru_step(token_idx, h, vwi_blk, wh_blk, bh_row):
    """nn.GRUCell step with the token-embedding lookup folded into VWi_b."""
    onehot = (jax.lax.broadcasted_iota(jnp.int32, (1, VOCAB_PAD), 1)
              == token_idx).astype(jnp.float32)                         # (1, 16)
    xg = jnp.dot(onehot, vwi_blk, preferred_element_type=jnp.float32)   # (1,128), bi folded
    hg = jnp.dot(h, wh_blk, preferred_element_type=jnp.float32) + bh_row
    r = jax.nn.sigmoid(xg[:, 0:H] + hg[:, 0:H])
    z = jax.nn.sigmoid(xg[:, H:2 * H] + hg[:, H:2 * H])
    n = jnp.tanh(xg[:, 2 * H:3 * H] + r * hg[:, 2 * H:3 * H])
    return (1.0 - z) * n + z * h                                         # (1, H)


# ---------------- the single fused decoder kernel ----------------------------
def _decoder_kernel(eps_ref, state_ref, wslab_ref, out_ref):
    b = pl.program_id(0)
    eps = eps_ref[0, 0]                              # 0.0 means "eps is None"
    state = state_ref[pl.ds(b, 1), :]                # (1, H) global graph embedding

    op_blk   = wslab_ref[ROW_OP_W:ROW_OP_W + H, :]           # (H, 128)
    o1_blk   = wslab_ref[ROW_O1_W:ROW_O1_W + H, :]
    wh_blk   = wslab_ref[ROW_GRU_WH:ROW_GRU_WH + H, :]
    vwi_blk  = wslab_ref[ROW_VWI:ROW_VWI + VOCAB_PAD, :]
    bias_blk = wslab_ref[ROW_BIAS:ROW_BIAS + 8, :]            # (8, 128)
    bh_row   = bias_blk[7:8, :]

    # ---- stage 1: get_operator + gru_cell ----------------------------------
    logits_op = _head_mlp(state, op_blk, bias_blk[0:1, :])
    op_idx, p_op = _softmax_eps_argmax(logits_op, float(OP_N), eps)
    state = _gru_step(op_idx, state, vwi_blk, wh_blk, bh_row)

    # ---- stage 2: get_object_1 + gru_cell -----------------------------------
    logits_o1 = _head_mlp(state, o1_blk, bias_blk[1:2, :])
    o1_idx, p_o1 = _softmax_eps_argmax(logits_o1, float(VAR_NUM), eps)
    state = _gru_step(o1_idx + VAR_TOK_BASE, state, vwi_blk, wh_blk, bh_row)

    # ---- stage 3: get_object_2 (relations) or get_attr (attributes) --------
    # Blend the WEIGHTS with the one-hot head selector, then run one MLP.
    head_idx = jnp.where(op_idx < N_RELATIONS, 0, op_idx - (N_RELATIONS - 1))
    w_blk = jnp.zeros((H, OUT_LANES), jnp.float32)
    b_row = jnp.zeros((1, OUT_LANES), jnp.float32)
    n3 = jnp.zeros((1, 1), jnp.float32)
    for k in range(N_S3_HEADS):                       # tiny, fully unrolled (VPU only)
        sel_k = (head_idx == k).astype(jnp.float32)   # (1,1) exact one-hot
        w_blk = w_blk + sel_k * wslab_ref[ROW_S3_W + H * k:ROW_S3_W + H * (k + 1), :]
        b_row = b_row + sel_k * bias_blk[2 + k:3 + k, :]
        n3 = n3 + sel_k * float(S3_WIDTHS[k])
    logits3 = _head_mlp(state, w_blk, b_row)
    s3_idx, p2 = _softmax_eps_argmax(logits3, n3, eps)

    # ---- outputs: (p_op * p_o1 * p2) + the three selected indices -----------
    p_final = p_op * p_o1 * p2                                           # (1, 1)
    row = jax.lax.broadcasted_iota(jnp.int32, (8, OUT_LANES), 0)
    lane = jax.lax.broadcasted_iota(jnp.int32, (8, OUT_LANES), 1)
    idx_row = (jnp.where(lane == 0, op_idx.astype(jnp.float32), 0.0)
               + jnp.where(lane == 1, o1_idx.astype(jnp.float32), 0.0)
               + jnp.where(lane == 2, s3_idx.astype(jnp.float32), 0.0))
    out_ref[...] = jnp.where(row == 0, p_final,
                             jnp.where(row == 1, idx_row, 0.0))          # (8, 128)


@functools.lru_cache(maxsize=None)
def _get_decoder(batch):
    call = pl.pallas_call(
        _decoder_kernel,
        out_shape=jax.ShapeDtypeStruct((batch * 8, OUT_LANES), jnp.float32),
        grid=(batch,),
        in_specs=[
            pl.BlockSpec(memory_space=pltpu.MemorySpace.SMEM),           # eps
            pl.BlockSpec((batch, H), lambda b: (0, 0)),                  # states (resident)
            pl.BlockSpec((TOTAL_ROWS, OUT_LANES), lambda b: (0, 0)),     # weight slab (resident)
        ],
        out_specs=pl.BlockSpec((8, OUT_LANES), lambda b: (b, 0)),
        compiler_params=pltpu.CompilerParams(
            dimension_semantics=("parallel",)),                          # both v7x TCs
    )
    return jax.jit(call)


# ---------------- deterministic parameter construction + packing -------------
def _lin(key, fan_in, fan_out):
    kw, kb = jax.random.split(key)
    bound = 1.0 / (fan_in ** 0.5)
    w = jax.random.uniform(kw, (fan_in, fan_out), jnp.float32, -bound, bound)
    b = jax.random.uniform(kb, (1, fan_out), jnp.float32, -bound, bound)
    return w, b


def _make_head(key, out_dim):
    k1, k2, k3 = jax.random.split(key, 3)
    return (_lin(k1, H, H), _lin(k2, H, H), _lin(k3, H, out_dim))


def _pack_head(slab, row0, bias_row, head):
    (w1, b1), (w2, b2), (w3, b3) = head
    slab = slab.at[row0:row0 + H, 0:H].set(w1)
    slab = slab.at[row0:row0 + H, H:2 * H].set(w2)
    slab = slab.at[row0:row0 + H, 2 * H:2 * H + w3.shape[1]].set(w3)
    slab = slab.at[bias_row, 0:H].set(b1[0])
    slab = slab.at[bias_row, H:2 * H].set(b2[0])
    slab = slab.at[bias_row, 2 * H:2 * H + b3.shape[1]].set(b3[0])
    return slab


def make_params(seed=0):
    key = jax.random.PRNGKey(seed)
    ks = jax.random.split(key, 5)
    slab = jnp.zeros((TOTAL_ROWS, OUT_LANES), jnp.float32)

    slab = _pack_head(slab, ROW_OP_W, ROW_BIAS + 0, _make_head(ks[0], OP_N))
    slab = _pack_head(slab, ROW_O1_W, ROW_BIAS + 1, _make_head(ks[1], VAR_NUM))
    s3_keys = jax.random.split(ks[2], N_S3_HEADS)
    for k, (kk, w) in enumerate(zip(s3_keys, S3_WIDTHS)):
        slab = _pack_head(slab, ROW_S3_W + H * k, ROW_BIAS + 2 + k, _make_head(kk, w))

    # nn.GRUCell(hidden_dim, hidden_dim): gate order (r, z, n), stored transposed
    # and gate-concatenated along the output dim -> (H, 3H).
    kg = jax.random.split(ks[3], 4)
    bound = 1.0 / (H ** 0.5)
    wi = jax.random.uniform(kg[0], (H, 3 * H), jnp.float32, -bound, bound)
    wh = jax.random.uniform(kg[1], (H, 3 * H), jnp.float32, -bound, bound)
    bi = jax.random.uniform(kg[2], (1, 3 * H), jnp.float32, -bound, bound)
    bh = jax.random.uniform(kg[3], (1, 3 * H), jnp.float32, -bound, bound)

    # TODO(synk): encoder.get_embedding + string-keyed embedding_layer are replaced
    # by this deterministic vocab table (rows 0..7 = OPERATION_LIST tokens, 8..15 = vars).
    vocab16 = 0.1 * jax.random.normal(ks[4], (VOCAB_PAD, H), jnp.float32)

    # Algebraic fold: embedding lookup + GRU input matmul  ->  onehot @ (vocab @ Wi + bi)
    vwi_b = jnp.dot(vocab16, wi) + bi                                    # (16, 3H)

    slab = slab.at[ROW_GRU_WH:ROW_GRU_WH + H, 0:3 * H].set(wh)
    slab = slab.at[ROW_VWI:ROW_VWI + VOCAB_PAD, 0:3 * H].set(vwi_b)
    slab = slab.at[ROW_BIAS + 7, 0:3 * H].set(bh[0])
    return {"slab": slab}


# ---------------- host glue (mirrors GlobalDecoder2.forward) -----------------
def global_decoder2_forward(graph_embedding, eps, params):
    """graph_embedding: (B, H) global embeddings (gnn_version == 'GNNGlobal').

    Returns (probs (B,) device array of p_op*p_o1*p2, list of B clauses)."""
    if graph_embedding.ndim == 1:
        graph_embedding = graph_embedding[None, :]
    batch = graph_embedding.shape[0]
    decode = _get_decoder(batch)
    # `eps is None` in PyTorch is equivalent to eps == 0.0 here.
    eps_arr = jnp.array([[0.0 if eps is None else float(eps)]], jnp.float32)

    out = decode(eps_arr, graph_embedding, params["slab"])   # (B*8, 128)
    out_host = jax.device_get(out)                           # single host sync
    probs = out[0::8, 0]                                     # (B,) device array

    # TODO(synk): Categorical sampling (training path) replaced by the deterministic
    # test_type == 'max' argmax branch, computed inside the kernel.
    clauses = []
    for b in range(batch):
        op_sel = int(round(float(out_host[b * 8 + 1, 0])))
        o1_sel = int(round(float(out_host[b * 8 + 1, 1])))
        sel2 = int(round(float(out_host[b * 8 + 1, 2])))
        operation = OPERATION_LIST[op_sel]
        object1 = f"var_{o1_sel}"
        if operation in ("left", "right", "front", "behind"):
            c2 = f"var_{AVAILABLE_OBJ_DICT[str(o1_sel)][sel2]}"
        else:
            c2 = CHOICES[operation][sel2]
        clauses.append([operation, c2, object1])
    return probs, clauses


# ---------------- demo --------------------------------------------------------
if __name__ == "__main__":
    params = make_params(seed=0)
    B = 2
    # global graph embeddings from the GNN (GNNGlobal): (B, hidden_dim)
    graph_embedding = 0.1 * jax.random.normal(
        jax.random.PRNGKey(0), (B, H), jnp.float32)
    eps = 0.1

    probs, clauses = global_decoder2_forward(graph_embedding, eps, params)
    probs = jax.block_until_ready(probs)

    assert probs.shape == (B,)
    assert all(float(p) > 0.0 for p in probs)
    assert len(clauses) == B and all(len(c) == 3 for c in clauses)
    print("KERNEL_OK")
</pallas_src>

<mosaic_0001>
module attributes {stable_mosaic.version = 11 : i64} {
  func.func @_decoder_kernel(%arg0: i32, %arg1: memref<1x1xf32, #tpu.memory_space<smem>>, %arg2: memref<2x32xf32, #tpu.memory_space<vmem>>, %arg3: memref<280x128xf32, #tpu.memory_space<vmem>>, %arg4: memref<8x128xf32, #tpu.memory_space<vmem>>) attributes {dimension_semantics = [#tpu.dimension_semantics<parallel>], iteration_bounds = array<i64: 2>, scalar_prefetch = 0 : i64, scratch_operands = 0 : i64, tpu.core_type = #tpu.core_type<tc>, window_params = [{transform_indices = @transform_0, window_bounds = array<i64: 1, 1>}, {pipeline_mode = #tpu.pipeline_mode<synchronous>, transform_indices = @transform_1, window_bounds = array<i64: 2, 32>}, {pipeline_mode = #tpu.pipeline_mode<synchronous>, transform_indices = @transform_2, window_bounds = array<i64: 280, 128>}, {transform_indices = @transform_3, window_bounds = array<i64: 8, 128>}]} {
    %c0 = arith.constant 0 : index
    %c0_0 = arith.constant 0 : index
    %0 = memref.load %arg1[%c0, %c0_0] : memref<1x1xf32, #tpu.memory_space<smem>>
    %1 = arith.index_cast %arg0 : i32 to index
    %c0_1 = arith.constant 0 : index
    %2 = vector.load %arg2[%1, %c0_1] : memref<2x32xf32, #tpu.memory_space<vmem>>, vector<1x32xf32>
    %c0_2 = arith.constant 0 : index
    %c0_3 = arith.constant 0 : index
    %3 = vector.load %arg3[%c0_2, %c0_3] : memref<280x128xf32, #tpu.memory_space<vmem>>, vector<32x128xf32>
    %c32 = arith.constant 32 : index
    %c0_4 = arith.constant 0 : index
    %4 = vector.load %arg3[%c32, %c0_4] : memref<280x128xf32, #tpu.memory_space<vmem>>, vector<32x128xf32>
    %c224 = arith.constant 224 : index
    %c0_5 = arith.constant 0 : index
    %5 = vector.load %arg3[%c224, %c0_5] : memref<280x128xf32, #tpu.memory_space<vmem>>, vector<32x128xf32>
    %c256 = arith.constant 256 : index
    %c0_6 = arith.constant 0 : index
    %6 = vector.load %arg3[%c256, %c0_6] : memref<280x128xf32, #tpu.memory_space<vmem>>, vector<16x128xf32>
    %c272 = arith.constant 272 : index
    %c0_7 = arith.constant 0 : index
    %7 = vector.load %arg3[%c272, %c0_7] : memref<280x128xf32, #tpu.memory_space<vmem>>, vector<8x128xf32>
    %8 = vector.extract_strided_slice %7 {offsets = [7, 0], sizes = [1, 128], strides = [1, 1]} : vector<8x128xf32> to vector<1x128xf32>
    %9 = vector.extract_strided_slice %7 {offsets = [0, 0], sizes = [1, 128], strides = [1, 1]} : vector<8x128xf32> to vector<1x128xf32>
    %10 = vector.extract_strided_slice %3 {offsets = [0, 0], sizes = [32, 32], strides = [1, 1]} : vector<32x128xf32> to vector<32x32xf32>
    %11 = vector.extract_strided_slice %9 {offsets = [0, 0], sizes = [1, 32], strides = [1, 1]} : vector<1x128xf32> to vector<1x32xf32>
    %12 = vector.extract_strided_slice %3 {offsets = [0, 32], sizes = [32, 32], strides = [1, 1]} : vector<32x128xf32> to vector<32x32xf32>
    %13 = vector.extract_strided_slice %9 {offsets = [0, 32], sizes = [1, 32], strides = [1, 1]} : vector<1x128xf32> to vector<1x32xf32>
    %14 = vector.extract_strided_slice %3 {offsets = [0, 64], sizes = [32, 32], strides = [1, 1]} : vector<32x128xf32> to vector<32x32xf32>
    %15 = vector.extract_strided_slice %9 {offsets = [0, 64], sizes = [1, 32], strides = [1, 1]} : vector<1x128xf32> to vector<1x32xf32>
    %cst = arith.constant dense<0.000000e+00> : vector<1x32xf32>
    %16 = tpu.matmul %2, %10, %cst {dimension_numbers = #tpu.dot_dimension_numbers<[1], [0], [0], [1], [0, 0, 1, 1], [], []>} : vector<1x32xf32>, vector<32x32xf32>, vector<1x32xf32> -> vector<1x32xf32>
    %17 = arith.addf %16, %11 : vector<1x32xf32>
    %cst_8 = arith.constant 0.000000e+00 : f32
    %18 = vector.broadcast %cst_8 : f32 to vector<1x32xf32>
    %19 = arith.maximumf %17, %18 : vector<1x32xf32>
    %cst_9 = arith.constant dense<0.000000e+00> : vector<1x32xf32>
    %20 = tpu.matmul %19, %12, %cst_9 {dimension_numbers = #tpu.dot_dimension_numbers<[1], [0], [0], [1], [0, 0, 1, 1], [], []>} : vector<1x32xf32>, vector<32x32xf32>, vector<1x32xf32> -> vector<1x32xf32>
    %21 = arith.addf %20, %13 : vector<1x32xf32>
    %cst_10 = arith.constant 0.000000e+00 : f32
    %22 = vector.broadcast %cst_10 : f32 to vector<1x32xf32>
    %23 = arith.maximumf %21, %22 : vector<1x32xf32>
    %cst_11 = arith.constant dense<0.000000e+00> : vector<1x32xf32>
    %24 = tpu.matmul %23, %14, %cst_11 {dimension_numbers = #tpu.dot_dimension_numbers<[1], [0], [0], [1], [0, 0, 1, 1], [], []>} : vector<1x32xf32>, vector<32x32xf32>, vector<1x32xf32> -> vector<1x32xf32>
    %25 = arith.addf %24, %15 : vector<1x32xf32>
    %26 = tpu.iota {dimensions = array<i32: 1>} : vector<1x32xi32>
    %27 = arith.sitofp %26 : vector<1x32xi32> to vector<1x32xf32>
    %cst_12 = arith.constant 8.000000e+00 : f32
    %28 = vector.broadcast %cst_12 : f32 to vector<1x32xf32>
    %29 = arith.cmpf olt, %27, %28 : vector<1x32xf32>
    %cst_13 = arith.constant -1.000000e+30 : f32
    %30 = vector.broadcast %cst_13 : f32 to vector<1x32xf32>
    %31 = arith.select %29, %25, %30 : vector<1x32xi1>, vector<1x32xf32>
    %cst_14 = arith.constant dense<0xFF800000> : vector<1xf32>
    %32 = vector.multi_reduction <maximumf>, %31, %cst_14 [1] : vector<1x32xf32> to vector<1xf32>
    %33 = vector.shape_cast %32 : vector<1xf32> to vector<1x1xf32>
    %34 = vector.broadcast %33 : vector<1x1xf32> to vector<1x32xf32>
    %35 = arith.subf %31, %34 : vector<1x32xf32>
    %36 = math.exp %35 : vector<1x32xf32>
    %cst_15 = arith.constant 0.000000e+00 : f32
    %37 = vector.broadcast %cst_15 : f32 to vector<1x32xf32>
    %38 = arith.select %29, %36, %37 : vector<1x32xi1>, vector<1x32xf32>
    %cst_16 = arith.constant dense<0.000000e+00> : vector<1xf32>
    %39 = vector.multi_reduction <add>, %38, %cst_16 [1] : vector<1x32xf32> to vector<1xf32>
    %40 = vector.shape_cast %39 : vector<1xf32> to vector<1x1xf32>
    %41 = vector.broadcast %40 : vector<1x1xf32> to vector<1x32xf32>
    %42 = arith.divf %38, %41 : vector<1x32xf32>
    %cst_17 = arith.constant 1.000000e+00 : f32
    %43 = arith.subf %cst_17, %0 : f32
    %44 = vector.broadcast %43 : f32 to vector<1x32xf32>
    %45 = arith.mulf %42, %44 : vector<1x32xf32>
    %cst_18 = arith.constant 8.000000e+00 : f32
    %46 = arith.divf %0, %cst_18 : f32
    %47 = vector.broadcast %46 : f32 to vector<1x32xf32>
    %48 = arith.addf %45, %47 : vector<1x32xf32>
    %cst_19 = arith.constant 0.000000e+00 : f32
    %49 = vector.broadcast %cst_19 : f32 to vector<1x32xf32>
    %50 = arith.select %29, %48, %49 : vector<1x32xi1>, vector<1x32xf32>
    %cst_20 = arith.constant dense<0xFF800000> : vector<1xf32>
    %51 = vector.multi_reduction <maximumf>, %50, %cst_20 [1] : vector<1x32xf32> to vector<1xf32>
    %52 = vector.shape_cast %51 : vector<1xf32> to vector<1x1xf32>
    %53 = vector.broadcast %52 : vector<1x1xf32> to vector<1x32xf32>
    %54 = arith.cmpf oge, %50, %53 : vector<1x32xf32>
    %c32_i32 = arith.constant 32 : i32
    %55 = vector.broadcast %c32_i32 : i32 to vector<1x32xi32>
    %56 = arith.select %54, %26, %55 : vector<1x32xi1>, vector<1x32xi32>
    %cst_21 = arith.constant dense<2147483647> : vector<1xi32>
    %57 = vector.multi_reduction <minsi>, %56, %cst_21 [1] : vector<1x32xi32> to vector<1xi32>
    %58 = vector.shape_cast %57 : vector<1xi32> to vector<1x1xi32>
    %59 = vector.broadcast %58 : vector<1x1xi32> to vector<1x32xi32>
    %60 = arith.cmpi eq, %26, %59 : vector<1x32xi32>
    %cst_22 = arith.constant 0.000000e+00 : f32
    %61 = vector.broadcast %cst_22 : f32 to vector<1x32xf32>
    %62 = arith.select %60, %50, %61 : vector<1x32xi1>, vector<1x32xf32>
    %cst_23 = arith.constant dense<0.000000e+00> : vector<1xf32>
    %63 = vector.multi_reduction <add>, %62, %cst_23 [1] : vector<1x32xf32> to vector<1xf32>
    %64 = vector.shape_cast %63 : vector<1xf32> to vector<1x1xf32>
    %65 = tpu.iota {dimensions = array<i32: 1>} : vector<1x16xi32>
    %66 = vector.broadcast %58 : vector<1x1xi32> to vector<1x16xi32>
    %67 = arith.cmpi eq, %65, %66 : vector<1x16xi32>
    %68 = arith.extui %67 : vector<1x16xi1> to vector<1x16xi32>
    %69 = arith.sitofp %68 : vector<1x16xi32> to vector<1x16xf32>
    %cst_24 = arith.constant dense<0.000000e+00> : vector<1x128xf32>
    %70 = tpu.matmul %69, %6, %cst_24 {dimension_numbers = #tpu.dot_dimension_numbers<[1], [0], [0], [1], [0, 0, 1, 1], [], []>} : vector<1x16xf32>, vector<16x128xf32>, vector<1x128xf32> -> vector<1x128xf32>
    %cst_25 = arith.constant dense<0.000000e+00> : vector<1x128xf32>
    %71 = tpu.matmul %2, %5, %cst_25 {dimension_numbers = #tpu.dot_dimension_numbers<[1], [0], [0], [1], [0, 0, 1, 1], [], []>} : vector<1x32xf32>, vector<32x128xf32>, vector<1x128xf32> -> vector<1x128xf32>
    %72 = arith.addf %71, %8 : vector<1x128xf32>
    %73 = vector.extract_strided_slice %70 {offsets = [0, 0], sizes = [1, 32], strides = [1, 1]} : vector<1x128xf32> to vector<1x32xf32>
    %74 = vector.extract_strided_slice %72 {offsets = [0, 0], sizes = [1, 32], strides = [1, 1]} : vector<1x128xf32> to vector<1x32xf32>
    %75 = arith.addf %73, %74 : vector<1x32xf32>
    %76 = arith.negf %75 : vector<1x32xf32>
    %77 = math.exp %76 : vector<1x32xf32>
    %cst_26 = arith.constant 1.000000e+00 : f32
    %78 = vector.broadcast %cst_26 : f32 to vector<1x32xf32>
    %79 = arith.addf %78, %77 : vector<1x32xf32>
    %80 = arith.divf %78, %79 : vector<1x32xf32>
    %81 = vector.extract_strided_slice %70 {offsets = [0, 32], sizes = [1, 32], strides = [1, 1]} : vector<1x128xf32> to vector<1x32xf32>
    %82 = vector.extract_strided_slice %72 {offsets = [0, 32], sizes = [1, 32], strides = [1, 1]} : vector<1x128xf32> to vector<1x32xf32>
    %83 = arith.addf %81, %82 : vector<1x32xf32>
    %84 = arith.negf %83 : vector<1x32xf32>
    %85 = math.exp %84 : vector<1x32xf32>
    %cst_27 = arith.constant 1.000000e+00 : f32
    %86 = vector.broadcast %cst_27 : f32 to vector<1x32xf32>
    %87 = arith.addf %86, %85 : vector<1x32xf32>
    %88 = arith.divf %86, %87 : vector<1x32xf32>
    %89 = vector.extract_strided_slice %70 {offsets = [0, 64], sizes = [1, 32], strides = [1, 1]} : vector<1x128xf32> to vector<1x32xf32>
    %90 = vector.extract_strided_slice %72 {offsets = [0, 64], sizes = [1, 32], strides = [1, 1]} : vector<1x128xf32> to vector<1x32xf32>
    %91 = arith.mulf %80, %90 : vector<1x32xf32>
    %92 = arith.addf %89, %91 : vector<1x32xf32>
    %93 = math.tanh %92 : vector<1x32xf32>
    %cst_28 = arith.constant 1.000000e+00 : f32
    %94 = vector.broadcast %cst_28 : f32 to vector<1x32xf32>
    %95 = arith.subf %94, %88 : vector<1x32xf32>
    %96 = arith.mulf %95, %93 : vector<1x32xf32>
    %97 = arith.mulf %88, %2 : vector<1x32xf32>
    %98 = arith.addf %96, %97 : vector<1x32xf32>
    %99 = vector.extract_strided_slice %7 {offsets = [1, 0], sizes = [1, 128], strides = [1, 1]} : vector<8x128xf32> to vector<1x128xf32>
    %100 = vector.extract_strided_slice %4 {offsets = [0, 0], sizes = [32, 32], strides = [1, 1]} : vector<32x128xf32> to vector<32x32xf32>
    %101 = vector.extract_strided_slice %99 {offsets = [0, 0], sizes = [1, 32], strides = [1, 1]} : vector<1x128xf32> to vector<1x32xf32>
    %102 = vector.extract_strided_slice %4 {offsets = [0, 32], sizes = [32, 32], strides = [1, 1]} : vector<32x128xf32> to vector<32x32xf32>
    %103 = vector.extract_strided_slice %99 {offsets = [0, 32], sizes = [1, 32], strides = [1, 1]} : vector<1x128xf32> to vector<1x32xf32>
    %104 = vector.extract_strided_slice %4 {offsets = [0, 64], sizes = [32, 32], strides = [1, 1]} : vector<32x128xf32> to vector<32x32xf32>
    %105 = vector.extract_strided_slice %99 {offsets = [0, 64], sizes = [1, 32], strides = [1, 1]} : vector<1x128xf32> to vector<1x32xf32>
    %cst_29 = arith.constant dense<0.000000e+00> : vector<1x32xf32>
    %106 = tpu.matmul %98, %100, %cst_29 {dimension_numbers = #tpu.dot_dimension_numbers<[1], [0], [0], [1], [0, 0, 1, 1], [], []>} : vector<1x32xf32>, vector<32x32xf32>, vector<1x32xf32> -> vector<1x32xf32>
    %107 = arith.addf %106, %101 : vector<1x32xf32>
    %cst_30 = arith.constant 0.000000e+00 : f32
    %108 = vector.broadcast %cst_30 : f32 to vector<1x32xf32>
    %109 = arith.maximumf %107, %108 : vector<1x32xf32>
    %cst_31 = arith.constant dense<0.000000e+00> : vector<1x32xf32>
    %110 = tpu.matmul %109, %102, %cst_31 {dimension_numbers = #tpu.dot_dimension_numbers<[1], [0], [0], [1], [0, 0, 1, 1], [], []>} : vector<1x32xf32>, vector<32x32xf32>, vector<1x32xf32> -> vector<1x32xf32>
    %111 = arith.addf %110, %103 : vector<1x32xf32>
    %cst_32 = arith.constant 0.000000e+00 : f32
    %112 = vector.broadcast %cst_32 : f32 to vector<1x32xf32>
    %113 = arith.maximumf %111, %112 : vector<1x32xf32>
    %cst_33 = arith.constant dense<0.000000e+00> : vector<1x32xf32>
    %114 = tpu.matmul %113, %104, %cst_33 {dimension_numbers = #tpu.dot_dimension_numbers<[1], [0], [0], [1], [0, 0, 1, 1], [], []>} : vector<1x32xf32>, vector<32x32xf32>, vector<1x32xf32> -> vector<1x32xf32>
    %115 = arith.addf %114, %105 : vector<1x32xf32>
    %116 = tpu.iota {dimensions = array<i32: 1>} : vector<1x32xi32>
    %117 = arith.sitofp %116 : vector<1x32xi32> to vector<1x32xf32>
    %cst_34 = arith.constant 8.000000e+00 : f32
    %118 = vector.broadcast %cst_34 : f32 to vector<1x32xf32>
    %119 = arith.cmpf olt, %117, %118 : vector<1x32xf32>
    %cst_35 = arith.constant -1.000000e+30 : f32
    %120 = vector.broadcast %cst_35 : f32 to vector<1x32xf32>
    %121 = arith.select %119, %115, %120 : vector<1x32xi1>, vector<1x32xf32>
    %cst_36 = arith.constant dense<0xFF800000> : vector<1xf32>
    %122 = vector.multi_reduction <maximumf>, %121, %cst_36 [1] : vector<1x32xf32> to vector<1xf32>
    %123 = vector.shape_cast %122 : vector<1xf32> to vector<1x1xf32>
    %124 = vector.broadcast %123 : vector<1x1xf32> to vector<1x32xf32>
    %125 = arith.subf %121, %124 : vector<1x32xf32>
    %126 = math.exp %125 : vector<1x32xf32>
    %cst_37 = arith.constant 0.000000e+00 : f32
    %127 = vector.broadcast %cst_37 : f32 to vector<1x32xf32>
    %128 = arith.select %119, %126, %127 : vector<1x32xi1>, vector<1x32xf32>
    %cst_38 = arith.constant dense<0.000000e+00> : vector<1xf32>
    %129 = vector.multi_reduction <add>, %128, %cst_38 [1] : vector<1x32xf32> to vector<1xf32>
    %130 = vector.shape_cast %129 : vector<1xf32> to vector<1x1xf32>
    %131 = vector.broadcast %130 : vector<1x1xf32> to vector<1x32xf32>
    %132 = arith.divf %128, %131 : vector<1x32xf32>
    %cst_39 = arith.constant 1.000000e+00 : f32
    %133 = arith.subf %cst_39, %0 : f32
    %134 = vector.broadcast %133 : f32 to vector<1x32xf32>
    %135 = arith.mulf %132, %134 : vector<1x32xf32>
    %cst_40 = arith.constant 8.000000e+00 : f32
    %136 = arith.divf %0, %cst_40 : f32
    %137 = vector.broadcast %136 : f32 to vector<1x32xf32>
    %138 = arith.addf %135, %137 : vector<1x32xf32>
    %cst_41 = arith.constant 0.000000e+00 : f32
    %139 = vector.broadcast %cst_41 : f32 to vector<1x32xf32>
    %140 = arith.select %119, %138, %139 : vector<1x32xi1>, vector<1x32xf32>
    %cst_42 = arith.constant dense<0xFF800000> : vector<1xf32>
    %141 = vector.multi_reduction <maximumf>, %140, %cst_42 [1] : vector<1x32xf32> to vector<1xf32>
    %142 = vector.shape_cast %141 : vector<1xf32> to vector<1x1xf32>
    %143 = vector.broadcast %142 : vector<1x1xf32> to vector<1x32xf32>
    %144 = arith.cmpf oge, %140, %143 : vector<1x32xf32>
    %c32_i32_43 = arith.constant 32 : i32
    %145 = vector.broadcast %c32_i32_43 : i32 to vector<1x32xi32>
    %146 = arith.select %144, %116, %145 : vector<1x32xi1>, vector<1x32xi32>
    %cst_44 = arith.constant dense<2147483647> : vector<1xi32>
    %147 = vector.multi_reduction <minsi>, %146, %cst_44 [1] : vector<1x32xi32> to vector<1xi32>
    %148 = vector.shape_cast %147 : vector<1xi32> to vector<1x1xi32>
    %149 = vector.broadcast %148 : vector<1x1xi32> to vector<1x32xi32>
    %150 = arith.cmpi eq, %116, %149 : vector<1x32xi32>
    %cst_45 = arith.constant 0.000000e+00 : f32
    %151 = vector.broadcast %cst_45 : f32 to vector<1x32xf32>
    %152 = arith.select %150, %140, %151 : vector<1x32xi1>, vector<1x32xf32>
    %cst_46 = arith.constant dense<0.000000e+00> : vector<1xf32>
    %153 = vector.multi_reduction <add>, %152, %cst_46 [1] : vector<1x32xf32> to vector<1xf32>
    %154 = vector.shape_cast %153 : vector<1xf32> to vector<1x1xf32>
    %c8_i32 = arith.constant 8 : i32
    %155 = vector.broadcast %c8_i32 : i32 to vector<1x1xi32>
    %156 = arith.addi %148, %155 : vector<1x1xi32>
    %157 = tpu.iota {dimensions = array<i32: 1>} : vector<1x16xi32>
    %158 = vector.broadcast %156 : vector<1x1xi32> to vector<1x16xi32>
    %159 = arith.cmpi eq, %157, %158 : vector<1x16xi32>
    %160 = arith.extui %159 : vector<1x16xi1> to vector<1x16xi32>
    %161 = arith.sitofp %160 : vector<1x16xi32> to vector<1x16xf32>
    %cst_47 = arith.constant dense<0.000000e+00> : vector<1x128xf32>
    %162 = tpu.matmul %161, %6, %cst_47 {dimension_numbers = #tpu.dot_dimension_numbers<[1], [0], [0], [1], [0, 0, 1, 1], [], []>} : vector<1x16xf32>, vector<16x128xf32>, vector<1x128xf32> -> vector<1x128xf32>
    %cst_48 = arith.constant dense<0.000000e+00> : vector<1x128xf32>
    %163 = tpu.matmul %98, %5, %cst_48 {dimension_numbers = #tpu.dot_dimension_numbers<[1], [0], [0], [1], [0, 0, 1, 1], [], []>} : vector<1x32xf32>, vector<32x128xf32>, vector<1x128xf32> -> vector<1x128xf32>
    %164 = arith.addf %163, %8 : vector<1x128xf32>
    %165 = vector.extract_strided_slice %162 {offsets = [0, 0], sizes = [1, 32], strides = [1, 1]} : vector<1x128xf32> to vector<1x32xf32>
    %166 = vector.extract_strided_slice %164 {offsets = [0, 0], sizes = [1, 32], strides = [1, 1]} : vector<1x128xf32> to vector<1x32xf32>
    %167 = arith.addf %165, %166 : vector<1x32xf32>
    %168 = arith.negf %167 : vector<1x32xf32>
    %169 = math.exp %168 : vector<1x32xf32>
    %cst_49 = arith.constant 1.000000e+00 : f32
    %170 = vector.broadcast %cst_49 : f32 to vector<1x32xf32>
    %171 = arith.addf %170, %169 : vector<1x32xf32>
    %172 = arith.divf %170, %171 : vector<1x32xf32>
    %173 = vector.extract_strided_slice %162 {offsets = [0, 32], sizes = [1, 32], strides = [1, 1]} : vector<1x128xf32> to vector<1x32xf32>
    %174 = vector.extract_strided_slice %164 {offsets = [0, 32], sizes = [1, 32], strides = [1, 1]} : vector<1x128xf32> to vector<1x32xf32>
    %175 = arith.addf %173, %174 : vector<1x32xf32>
    %176 = arith.negf %175 : vector<1x32xf32>
    %177 = math.exp %176 : vector<1x32xf32>
    %cst_50 = arith.constant 1.000000e+00 : f32
    %178 = vector.broadcast %cst_50 : f32 to vector<1x32xf32>
    %179 = arith.addf %178, %177 : vector<1x32xf32>
    %180 = arith.divf %178, %179 : vector<1x32xf32>
    %181 = vector.extract_strided_slice %162 {offsets = [0, 64], sizes = [1, 32], strides = [1, 1]} : vector<1x128xf32> to vector<1x32xf32>
    %182 = vector.extract_strided_slice %164 {offsets = [0, 64], sizes = [1, 32], strides = [1, 1]} : vector<1x128xf32> to vector<1x32xf32>
    %183 = arith.mulf %172, %182 : vector<1x32xf32>
    %184 = arith.addf %181, %183 : vector<1x32xf32>
    %185 = math.tanh %184 : vector<1x32xf32>
    %cst_51 = arith.constant 1.000000e+00 : f32
    %186 = vector.broadcast %cst_51 : f32 to vector<1x32xf32>
    %187 = arith.subf %186, %180 : vector<1x32xf32>
    %188 = arith.mulf %187, %185 : vector<1x32xf32>
    %189 = arith.mulf %180, %98 : vector<1x32xf32>
    %190 = arith.addf %188, %189 : vector<1x32xf32>
    %c4_i32 = arith.constant 4 : i32
    %191 = vector.broadcast %c4_i32 : i32 to vector<1x1xi32>
    %192 = arith.cmpi slt, %58, %191 : vector<1x1xi32>
    %c3_i32 = arith.constant 3 : i32
    %193 = vector.broadcast %c3_i32 : i32 to vector<1x1xi32>
    %194 = arith.subi %58, %193 : vector<1x1xi32>
    %c0_i32 = arith.constant 0 : i32
    %195 = vector.broadcast %c0_i32 : i32 to vector<1x1xi32>
    %196 = arith.select %192, %195, %194 : vector<1x1xi1>, vector<1x1xi32>
    %cst_52 = arith.constant 0.000000e+00 : f32
    %197 = vector.broadcast %cst_52 : f32 to vector<32x128xf32>
    %cst_53 = arith.constant 0.000000e+00 : f32
    %198 = vector.broadcast %cst_53 : f32 to vector<1x128xf32>
    %cst_54 = arith.constant 0.000000e+00 : f32
    %199 = vector.broadcast %cst_54 : f32 to vector<1x1xf32>
    %c0_i32_55 = arith.constant 0 : i32
    %200 = vector.broadcast %c0_i32_55 : i32 to vector<1x1xi32>
    %201 = arith.cmpi eq, %196, %200 : vector<1x1xi32>
    %202 = arith.extui %201 : vector<1x1xi1> to vector<1x1xi32>
    %203 = arith.sitofp %202 : vector<1x1xi32> to vector<1x1xf32>
    %c64 = arith.constant 64 : index
    %c0_56 = arith.constant 0 : index
    %204 = vector.load %arg3[%c64, %c0_56] : memref<280x128xf32, #tpu.memory_space<vmem>>, vector<32x128xf32>
    %205 = vector.broadcast %203 : vector<1x1xf32> to vector<32x128xf32>
    %206 = arith.mulf %205, %204 : vector<32x128xf32>
    %207 = arith.addf %197, %206 : vector<32x128xf32>
    %208 = vector.extract_strided_slice %7 {offsets = [2, 0], sizes = [1, 128], strides = [1, 1]} : vector<8x128xf32> to vector<1x128xf32>
    %209 = vector.broadcast %203 : vector<1x1xf32> to vector<1x128xf32>
    %210 = arith.mulf %209, %208 : vector<1x128xf32>
    %211 = arith.addf %198, %210 : vector<1x128xf32>
    %cst_57 = arith.constant 7.000000e+00 : f32
    %212 = vector.broadcast %cst_57 : f32 to vector<1x1xf32>
    %213 = arith.mulf %203, %212 : vector<1x1xf32>
    %214 = arith.addf %199, %213 : vector<1x1xf32>
    %c1_i32 = arith.constant 1 : i32
    %215 = vector.broadcast %c1_i32 : i32 to vector<1x1xi32>
    %216 = arith.cmpi eq, %196, %215 : vector<1x1xi32>
    %217 = arith.extui %216 : vector<1x1xi1> to vector<1x1xi32>
    %218 = arith.sitofp %217 : vector<1x1xi32> to vector<1x1xf32>
    %c96 = arith.constant 96 : index
    %c0_58 = arith.constant 0 : index
    %219 = vector.load %arg3[%c96, %c0_58] : memref<280x128xf32, #tpu.memory_space<vmem>>, vector<32x128xf32>
    %220 = vector.broadcast %218 : vector<1x1xf32> to vector<32x128xf32>
    %221 = arith.mulf %220, %219 : vector<32x128xf32>
    %222 = arith.addf %207, %221 : vector<32x128xf32>
    %223 = vector.extract_strided_slice %7 {offsets = [3, 0], sizes = [1, 128], strides = [1, 1]} : vector<8x128xf32> to vector<1x128xf32>
    %224 = vector.broadcast %218 : vector<1x1xf32> to vector<1x128xf32>
    %225 = arith.mulf %224, %223 : vector<1x128xf32>
    %226 = arith.addf %211, %225 : vector<1x128xf32>
    %cst_59 = arith.constant 4.000000e+00 : f32
    %227 = vector.broadcast %cst_59 : f32 to vector<1x1xf32>
    %228 = arith.mulf %218, %227 : vector<1x1xf32>
    %229 = arith.addf %214, %228 : vector<1x1xf32>
    %c2_i32 = arith.constant 2 : i32
    %230 = vector.broadcast %c2_i32 : i32 to vector<1x1xi32>
    %231 = arith.cmpi eq, %196, %230 : vector<1x1xi32>
    %232 = arith.extui %231 : vector<1x1xi1> to vector<1x1xi32>
    %233 = arith.sitofp %232 : vector<1x1xi32> to vector<1x1xf32>
    %c128 = arith.constant 128 : index
    %c0_60 = arith.constant 0 : index
    %234 = vector.load %arg3[%c128, %c0_60] : memref<280x128xf32, #tpu.memory_space<vmem>>, vector<32x128xf32>
    %235 = vector.broadcast %233 : vector<1x1xf32> to vector<32x128xf32>
    %236 = arith.mulf %235, %234 : vector<32x128xf32>
    %237 = arith.addf %222, %236 : vector<32x128xf32>
    %238 = vector.extract_strided_slice %7 {offsets = [4, 0], sizes = [1, 128], strides = [1, 1]} : vector<8x128xf32> to vector<1x128xf32>
    %239 = vector.broadcast %233 : vector<1x1xf32> to vector<1x128xf32>
    %240 = arith.mulf %239, %238 : vector<1x128xf32>
    %241 = arith.addf %226, %240 : vector<1x128xf32>
    %cst_61 = arith.constant 2.000000e+00 : f32
    %242 = vector.broadcast %cst_61 : f32 to vector<1x1xf32>
    %243 = arith.mulf %233, %242 : vector<1x1xf32>
    %244 = arith.addf %229, %243 : vector<1x1xf32>
    %c3_i32_62 = arith.constant 3 : i32
    %245 = vector.broadcast %c3_i32_62 : i32 to vector<1x1xi32>
    %246 = arith.cmpi eq, %196, %245 : vector<1x1xi32>
    %247 = arith.extui %246 : vector<1x1xi1> to vector<1x1xi32>
    %248 = arith.sitofp %247 : vector<1x1xi32> to vector<1x1xf32>
    %c160 = arith.constant 160 : index
    %c0_63 = arith.constant 0 : index
    %249 = vector.load %arg3[%c160, %c0_63] : memref<280x128xf32, #tpu.memory_space<vmem>>, vector<32x128xf32>
    %250 = vector.broadcast %248 : vector<1x1xf32> to vector<32x128xf32>
    %251 = arith.mulf %250, %249 : vector<32x128xf32>
    %252 = arith.addf %237, %251 : vector<32x128xf32>
    %253 = vector.extract_strided_slice %7 {offsets = [5, 0], sizes = [1, 128], strides = [1, 1]} : vector<8x128xf32> to vector<1x128xf32>
    %254 = vector.broadcast %248 : vector<1x1xf32> to vector<1x128xf32>
    %255 = arith.mulf %254, %253 : vector<1x128xf32>
    %256 = arith.addf %241, %255 : vector<1x128xf32>
    %cst_64 = arith.constant 2.000000e+00 : f32
    %257 = vector.broadcast %cst_64 : f32 to vector<1x1xf32>
    %258 = arith.mulf %248, %257 : vector<1x1xf32>
    %259 = arith.addf %244, %258 : vector<1x1xf32>
    %c4_i32_65 = arith.constant 4 : i32
    %260 = vector.broadcast %c4_i32_65 : i32 to vector<1x1xi32>
    %261 = arith.cmpi eq, %196, %260 : vector<1x1xi32>
    %262 = arith.extui %261 : vector<1x1xi1> to vector<1x1xi32>
    %263 = arith.sitofp %262 : vector<1x1xi32> to vector<1x1xf32>
    %c192 = arith.constant 192 : index
    %c0_66 = arith.constant 0 : index
    %264 = vector.load %arg3[%c192, %c0_66] : memref<280x128xf32, #tpu.memory_space<vmem>>, vector<32x128xf32>
    %265 = vector.broadcast %263 : vector<1x1xf32> to vector<32x128xf32>
    %266 = arith.mulf %265, %264 : vector<32x128xf32>
    %267 = arith.addf %252, %266 : vector<32x128xf32>
    %268 = vector.extract_strided_slice %7 {offsets = [6, 0], sizes = [1, 128], strides = [1, 1]} : vector<8x128xf32> to vector<1x128xf32>
    %269 = vector.broadcast %263 : vector<1x1xf32> to vector<1x128xf32>
    %270 = arith.mulf %269, %268 : vector<1x128xf32>
    %271 = arith.addf %256, %270 : vector<1x128xf32>
    %cst_67 = arith.constant 3.000000e+00 : f32
    %272 = vector.broadcast %cst_67 : f32 to vector<1x1xf32>
    %273 = arith.mulf %263, %272 : vector<1x1xf32>
    %274 = arith.addf %259, %273 : vector<1x1xf32>
    %275 = vector.extract_strided_slice %267 {offsets = [0, 0], sizes = [32, 32], strides = [1, 1]} : vector<32x128xf32> to vector<32x32xf32>
    %276 = vector.extract_strided_slice %271 {offsets = [0, 0], sizes = [1, 32], strides = [1, 1]} : vector<1x128xf32> to vector<1x32xf32>
    %277 = vector.extract_strided_slice %267 {offsets = [0, 32], sizes = [32, 32], strides = [1, 1]} : vector<32x128xf32> to vector<32x32xf32>
    %278 = vector.extract_strided_slice %271 {offsets = [0, 32], sizes = [1, 32], strides = [1, 1]} : vector<1x128xf32> to vector<1x32xf32>
    %279 = vector.extract_strided_slice %267 {offsets = [0, 64], sizes = [32, 32], strides = [1, 1]} : vector<32x128xf32> to vector<32x32xf32>
    %280 = vector.extract_strided_slice %271 {offsets = [0, 64], sizes = [1, 32], strides = [1, 1]} : vector<1x128xf32> to vector<1x32xf32>
    %cst_68 = arith.constant dense<0.000000e+00> : vector<1x32xf32>
    %281 = tpu.matmul %190, %275, %cst_68 {dimension_numbers = #tpu.dot_dimension_numbers<[1], [0], [0], [1], [0, 0, 1, 1], [], []>} : vector<1x32xf32>, vector<32x32xf32>, vector<1x32xf32> -> vector<1x32xf32>
    %282 = arith.addf %281, %276 : vector<1x32xf32>
    %cst_69 = arith.constant 0.000000e+00 : f32
    %283 = vector.broadcast %cst_69 : f32 to vector<1x32xf32>
    %284 = arith.maximumf %282, %283 : vector<1x32xf32>
    %cst_70 = arith.constant dense<0.000000e+00> : vector<1x32xf32>
    %285 = tpu.matmul %284, %277, %cst_70 {dimension_numbers = #tpu.dot_dimension_numbers<[1], [0], [0], [1], [0, 0, 1, 1], [], []>} : vector<1x32xf32>, vector<32x32xf32>, vector<1x32xf32> -> vector<1x32xf32>
    %286 = arith.addf %285, %278 : vector<1x32xf32>
    %cst_71 = arith.constant 0.000000e+00 : f32
    %287 = vector.broadcast %cst_71 : f32 to vector<1x32xf32>
    %288 = arith.maximumf %286, %287 : vector<1x32xf32>
    %cst_72 = arith.constant dense<0.000000e+00> : vector<1x32xf32>
    %289 = tpu.matmul %288, %279, %cst_72 {dimension_numbers = #tpu.dot_dimension_numbers<[1], [0], [0], [1], [0, 0, 1, 1], [], []>} : vector<1x32xf32>, vector<32x32xf32>, vector<1x32xf32> -> vector<1x32xf32>
    %290 = arith.addf %289, %280 : vector<1x32xf32>
    %291 = tpu.iota {dimensions = array<i32: 1>} : vector<1x32xi32>
    %292 = arith.sitofp %291 : vector<1x32xi32> to vector<1x32xf32>
    %293 = vector.broadcast %274 : vector<1x1xf32> to vector<1x32xf32>
    %294 = arith.cmpf olt, %292, %293 : vector<1x32xf32>
    %cst_73 = arith.constant -1.000000e+30 : f32
    %295 = vector.broadcast %cst_73 : f32 to vector<1x32xf32>
    %296 = arith.select %294, %290, %295 : vector<1x32xi1>, vector<1x32xf32>
    %cst_74 = arith.constant dense<0xFF800000> : vector<1xf32>
    %297 = vector.multi_reduction <maximumf>, %296, %cst_74 [1] : vector<1x32xf32> to vector<1xf32>
    %298 = vector.shape_cast %297 : vector<1xf32> to vector<1x1xf32>
    %299 = vector.broadcast %298 : vector<1x1xf32> to vector<1x32xf32>
    %300 = arith.subf %296, %299 : vector<1x32xf32>
    %301 = math.exp %300 : vector<1x32xf32>
    %cst_75 = arith.constant 0.000000e+00 : f32
    %302 = vector.broadcast %cst_75 : f32 to vector<1x32xf32>
    %303 = arith.select %294, %301, %302 : vector<1x32xi1>, vector<1x32xf32>
    %cst_76 = arith.constant dense<0.000000e+00> : vector<1xf32>
    %304 = vector.multi_reduction <add>, %303, %cst_76 [1] : vector<1x32xf32> to vector<1xf32>
    %305 = vector.shape_cast %304 : vector<1xf32> to vector<1x1xf32>
    %306 = vector.broadcast %305 : vector<1x1xf32> to vector<1x32xf32>
    %307 = arith.divf %303, %306 : vector<1x32xf32>
    %cst_77 = arith.constant 1.000000e+00 : f32
    %308 = arith.subf %cst_77, %0 : f32
    %309 = vector.broadcast %308 : f32 to vector<1x32xf32>
    %310 = arith.mulf %307, %309 : vector<1x32xf32>
    %311 = vector.broadcast %0 : f32 to vector<1x1xf32>
    %312 = arith.divf %311, %274 : vector<1x1xf32>
    %313 = vector.broadcast %312 : vector<1x1xf32> to vector<1x32xf32>
    %314 = arith.addf %310, %313 : vector<1x32xf32>
    %cst_78 = arith.constant 0.000000e+00 : f32
    %315 = vector.broadcast %cst_78 : f32 to vector<1x32xf32>
    %316 = arith.select %294, %314, %315 : vector<1x32xi1>, vector<1x32xf32>
    %cst_79 = arith.constant dense<0xFF800000> : vector<1xf32>
    %317 = vector.multi_reduction <maximumf>, %316, %cst_79 [1] : vector<1x32xf32> to vector<1xf32>
    %318 = vector.shape_cast %317 : vector<1xf32> to vector<1x1xf32>
    %319 = vector.broadcast %318 : vector<1x1xf32> to vector<1x32xf32>
    %320 = arith.cmpf oge, %316, %319 : vector<1x32xf32>
    %c32_i32_80 = arith.constant 32 : i32
    %321 = vector.broadcast %c32_i32_80 : i32 to vector<1x32xi32>
    %322 = arith.select %320, %291, %321 : vector<1x32xi1>, vector<1x32xi32>
    %cst_81 = arith.constant dense<2147483647> : vector<1xi32>
    %323 = vector.multi_reduction <minsi>, %322, %cst_81 [1] : vector<1x32xi32> to vector<1xi32>
    %324 = vector.shape_cast %323 : vector<1xi32> to vector<1x1xi32>
    %325 = vector.broadcast %324 : vector<1x1xi32> to vector<1x32xi32>
    %326 = arith.cmpi eq, %291, %325 : vector<1x32xi32>
    %cst_82 = arith.constant 0.000000e+00 : f32
    %327 = vector.broadcast %cst_82 : f32 to vector<1x32xf32>
    %328 = arith.select %326, %316, %327 : vector<1x32xi1>, vector<1x32xf32>
    %cst_83 = arith.constant dense<0.000000e+00> : vector<1xf32>
    %329 = vector.multi_reduction <add>, %328, %cst_83 [1] : vector<1x32xf32> to vector<1xf32>
    %330 = vector.shape_cast %329 : vector<1xf32> to vector<1x1xf32>
    %331 = arith.mulf %64, %154 : vector<1x1xf32>
    %332 = arith.mulf %331, %330 : vector<1x1xf32>
    %333 = tpu.iota {dimensions = array<i32: 0>} : vector<8x128xi32>
    %334 = tpu.iota {dimensions = array<i32: 1>} : vector<8x128xi32>
    %c0_i32_84 = arith.constant 0 : i32
    %335 = vector.broadcast %c0_i32_84 : i32 to vector<8x128xi32>
    %336 = arith.cmpi eq, %334, %335 : vector<8x128xi32>
    %337 = arith.sitofp %58 : vector<1x1xi32> to vector<1x1xf32>
    %cst_85 = arith.constant 0.000000e+00 : f32
    %338 = vector.shape_cast %337 : vector<1x1xf32> to vector<1x1xf32>
    %339 = vector.broadcast %338 : vector<1x1xf32> to vector<8x128xf32>
    %340 = vector.broadcast %cst_85 : f32 to vector<8x128xf32>
    %341 = arith.select %336, %339, %340 : vector<8x128xi1>, vector<8x128xf32>
    %c1_i32_86 = arith.constant 1 : i32
    %342 = vector.broadcast %c1_i32_86 : i32 to vector<8x128xi32>
    %343 = arith.cmpi eq, %334, %342 : vector<8x128xi32>
    %344 = arith.sitofp %148 : vector<1x1xi32> to vector<1x1xf32>
    %cst_87 = arith.constant 0.000000e+00 : f32
    %345 = vector.shape_cast %344 : vector<1x1xf32> to vector<1x1xf32>
    %346 = vector.broadcast %345 : vector<1x1xf32> to vector<8x128xf32>
    %347 = vector.broadcast %cst_87 : f32 to vector<8x128xf32>
    %348 = arith.select %343, %346, %347 : vector<8x128xi1>, vector<8x128xf32>
    %349 = arith.addf %341, %348 : vector<8x128xf32>
    %c2_i32_88 = arith.constant 2 : i32
    %350 = vector.broadcast %c2_i32_88 : i32 to vector<8x128xi32>
    %351 = arith.cmpi eq, %334, %350 : vector<8x128xi32>
    %352 = arith.sitofp %324 : vector<1x1xi32> to vector<1x1xf32>
    %cst_89 = arith.constant 0.000000e+00 : f32
    %353 = vector.shape_cast %352 : vector<1x1xf32> to vector<1x1xf32>
    %354 = vector.broadcast %353 : vector<1x1xf32> to vector<8x128xf32>
    %355 = vector.broadcast %cst_89 : f32 to vector<8x128xf32>
    %356 = arith.select %351, %354, %355 : vector<8x128xi1>, vector<8x128xf32>
    %357 = arith.addf %349, %356 : vector<8x128xf32>
    %c0_i32_90 = arith.constant 0 : i32
    %358 = vector.broadcast %c0_i32_90 : i32 to vector<8x128xi32>
    %359 = arith.cmpi eq, %333, %358 : vector<8x128xi32>
    %c1_i32_91 = arith.constant 1 : i32
    %360 = vector.broadcast %c1_i32_91 : i32 to vector<8x128xi32>
    %361 = arith.cmpi eq, %333, %360 : vector<8x128xi32>
    %cst_92 = arith.constant 0.000000e+00 : f32
    %362 = vector.broadcast %cst_92 : f32 to vector<8x128xf32>
    %363 = arith.select %361, %357, %362 : vector<8x128xi1>, vector<8x128xf32>
    %364 = vector.shape_cast %332 : vector<1x1xf32> to vector<1x1xf32>
    %365 = vector.broadcast %364 : vector<1x1xf32> to vector<8x128xf32>
    %366 = arith.select %359, %365, %363 : vector<8x128xi1>, vector<8x128xf32>
    %c0_93 = arith.constant 0 : index
    %c0_94 = arith.constant 0 : index
    %367 = vector.load %arg4[%c0_93, %c0_94] : memref<8x128xf32, #tpu.memory_space<vmem>>, vector<8x128xf32>
    tpu.vector_store %arg4[%c0_93, %c0_94], %366 {strides = array<i32>} : memref<8x128xf32, #tpu.memory_space<vmem>>, vector<8x128xf32>,
    return
  }
  func.func @transform_0(%arg0: i32) -> (i32, i32) {
    %c0_i32 = arith.constant 0 : i32
    %c0_i32_0 = arith.constant 0 : i32
    %c0_i32_1 = arith.constant 0 : i32
    return %c0_i32, %c0_i32_0 : i32, i32
  }
  func.func @transform_1(%arg0: i32) -> (i32, i32) {
    %c0_i32 = arith.constant 0 : i32
    %c0_i32_0 = arith.constant 0 : i32
    %c0_i32_1 = arith.constant 0 : i32
    return %c0_i32, %c0_i32_0 : i32, i32
  }
  func.func @transform_2(%arg0: i32) -> (i32, i32) {
    %c0_i32 = arith.constant 0 : i32
    %c0_i32_0 = arith.constant 0 : i32
    %c0_i32_1 = arith.constant 0 : i32
    return %c0_i32, %c0_i32_0 : i32, i32
  }
  func.func @transform_3(%arg0: i32) -> (i32, i32) {
    %c0_i32 = arith.constant 0 : i32
    %c0_i32_0 = arith.constant 0 : i32
    return %arg0, %c0_i32 : i32, i32
  }
}

</mosaic_0001>

<llo_original>
// kernel: tpu_custom_call.1
$region0: #{tpu_custom_call.1}
  #allocation0 [shape = 'u32[]', space=smem, size = 0x4, offset = 0x4, fixed_abs, tag = 'smem constant byte address 0x4 - core index']
  #allocation1 [shape = 'u32[144,128]{1,0:T(1,128)}', space=vmem, size = 0x12000, scoped, tag = 'internal scratch']
  #allocation2 [shape = 'f32[1,1]{1,0:T(1,128)S(6)}', space=smem, size = 0x200, scoped, tag = 'scoped memory for tpu_custom_call.1']
  %s0 = inlined_call_operand.<no memory space> [shape: f32[1,1], index: 0, kind: input, shape index: {}]
  %s1 = inlined_call_operand.vmem [shape: f32[2,32], index: 1, kind: input, shape index: {}]
  %s2 = inlined_call_operand.hbm [shape: f32[280,128], index: 2, kind: input, shape index: {}]
  %s3 = inlined_call_operand.hbm [shape: f32[16,128], index: 3, kind: output, shape index: {}]
  %s4 = sld [smem:[#allocation0]]
  $region49: #{tpu_custom_call.1} parent=0
    _
  %s6 = ssub.s32 1, %s4
  %s7 = scalar_select 0, %s6, %s4
  %8 = sst [smem:[#allocation2]] %s0
  $region1: #{tpu_custom_call.1} parent=0
    #allocation3 [shape = 'u8[143360]{0}', space=vmem, size = 0x23000, scoped, tag = 'input window, operand 2, single buffered']
    #allocation4 [shape = 's32[2]{0}', space=sflag, size = 0x8, scoped, tag = 'scoped memory for tpu_custom_call.1']
    #allocation5 [shape = 's32[2]{0}', space=sflag, size = 0x8, scoped, tag = 'scoped memory for tpu_custom_call.1']
    #allocation6 [shape = 'u8[8192]{0}', space=vmem, size = 0x2000, scoped, tag = 'output window, operand 0']
    %9 = vsyncpa [#allocation4], 0
    %10 = vsyncpa [#allocation5], 0
    %s11 = scalar_lea.sflag [#allocation5], 1
    %12 = vsyncpa %s11, 0
    loop: start=0, step=1, limit=4
    $region2: #{tpu_custom_call.1} parent=1 // loop_pre_header
      _
    $region3: #{tpu_custom_call.1} parent=1 // loop_header
      %s14 = sphi 0, %s18
      %p15 = scmp.ge.s32.totalorder %s14, 4
      %s22 = sphi 0, %s22
      %s24 = sphi 0, %s22
      %s25 = sphi 0, %s24
      %s39 = sphi 0, %s25
      %s43 = sphi 0, %s43
      %s45 = sphi 0, %s43
      %s46 = sphi 0, %s45
      %s60 = sphi 0, %s46
      %s64 = sphi 0, %s64
      %s66 = sphi 0, %s64
      %s67 = sphi 0, %s66
      %s81 = sphi 0, %s67
      %s87 = sphi 0, %s89
      %s90 = sphi 0, %s87
      %s91 = sphi 0, %s90
      %s107 = sphi 0, %s91
    $region4: #{tpu_custom_call.1} parent=1 // loop_header_branch
      %17 = sbr.rel (%p15) target = $region8
    $region5: #{tpu_custom_call.1} parent=1 // loop_body
      %s19 = ssub.s32 %s14, 1
      %s20 = ssub.s32 %s14, 2
      %s21 = sadd.s32 %s14, 1
      %s23 = sadd.s32 %s22, 1
      %p26 = scmp.eq.s32.totalorder %s14, 1
      %p27 = scmp.ne.s32.totalorder %s22, %s24
      %p28 = scmp.eq.s32.totalorder %s14, 0
      %p29 = por %p27, %p28
      %p30 = scmp.ne.s32.totalorder %s22, %s24
      %p31 = scmp.eq.s32.totalorder %s19, 1
      %p32 = por %p30, %p31
      %p33 = scmp.ne.s32.totalorder %s24, %s25
      %p34 = scmp.eq.s32.totalorder %s19, 0
      %p35 = por %p33, %p34
      %p36 = scmp.ne.s32.totalorder %s24, %s25
      %p37 = scmp.eq.s32.totalorder %s20, 1
      %p38 = por %p36, %p37
      %p40 = scmp.ne.s32.totalorder %s25, %s39
      %p41 = scmp.eq.s32.totalorder %s20, 0
      %p42 = por %p40, %p41
      %s44 = sadd.s32 %s43, 1
      %p47 = scmp.eq.s32.totalorder %s14, 1
      %p48 = scmp.ne.s32.totalorder %s43, %s45
      %p49 = scmp.eq.s32.totalorder %s14, 0
      %p50 = por %p48, %p49
      %p51 = scmp.ne.s32.totalorder %s43, %s45
      %p52 = scmp.eq.s32.totalorder %s19, 1
      %p53 = por %p51, %p52
      %p54 = scmp.ne.s32.totalorder %s45, %s46
      %p55 = scmp.eq.s32.totalorder %s19, 0
      %p56 = por %p54, %p55
      %p57 = scmp.ne.s32.totalorder %s45, %s46
      %p58 = scmp.eq.s32.totalorder %s20, 1
      %p59 = por %p57, %p58
      %p61 = scmp.ne.s32.totalorder %s46, %s60
      %p62 = scmp.eq.s32.totalorder %s20, 0
      %p63 = por %p61, %p62
      %s65 = sadd.s32 %s64, 1
      %p68 = scmp.eq.s32.totalorder %s14, 1
      %p69 = scmp.ne.s32.totalorder %s64, %s66
      %p70 = scmp.eq.s32.totalorder %s14, 0
      %p71 = por %p69, %p70
      %p72 = scmp.ne.s32.totalorder %s64, %s66
      %p73 = scmp.eq.s32.totalorder %s19, 1
      %p74 = por %p72, %p73
      %p75 = scmp.ne.s32.totalorder %s66, %s67
      %p76 = scmp.eq.s32.totalorder %s19, 0
      %p77 = por %p75, %p76
      %p78 = scmp.ne.s32.totalorder %s66, %s67
      %p79 = scmp.eq.s32.totalorder %s20, 1
      %p80 = por %p78, %p79
      %p82 = scmp.ne.s32.totalorder %s67, %s81
      %p83 = scmp.eq.s32.totalorder %s20, 0
      %p84 = por %p82, %p83
      %s85 = ssub.s32 %s14, %s21
      %p86 = scmp.eq.s32.totalorder %s85, 0
      %s88 = sadd.s32 %s87, 1
      %s89 = scalar_select %p86, %s87, %s88
      %p92 = pneg %p86
      %p93 = scmp.eq.s32.totalorder %s14, 1
      %p94 = por %p92, %p93
      %p95 = scmp.ne.s32.totalorder %s87, %s90
      %p96 = scmp.eq.s32.totalorder %s14, 0
      %p97 = por %p95, %p96
      %p98 = scmp.ne.s32.totalorder %s87, %s90
      %p99 = scmp.eq.s32.totalorder %s19, 1
      %p100 = por %p98, %p99
      %p101 = scmp.ne.s32.totalorder %s90, %s91
      %p102 = scmp.eq.s32.totalorder %s19, 0
      %p103 = por %p101, %p102
      %p104 = scmp.ne.s32.totalorder %s90, %s91
      %p105 = scmp.eq.s32.totalorder %s20, 1
      %p106 = por %p104, %p105
      %p108 = scmp.ne.s32.totalorder %s91, %s107
      %p109 = scmp.eq.s32.totalorder %s20, 0
      %p110 = por %p108, %p109
      %p111 = scmp.le.s32.totalorder 1, %s14
      %p112 = scmp.lt.s32.totalorder %s14, 3
      %p113 = pnand %p111, %p112
      %p114 = pneg %p113
      // Predicated region
      $region9: #{tpu_custom_call.1} parent=5 // pred_check
        _
      $region10: #{tpu_custom_call.1} parent=5 // pred_check_branch
        %116 = sbr.rel (%p113) target = $region12
      $region11: #{tpu_custom_call.1} parent=5 // pred_region
        %s117 = ssub.s32 %s14, 1
        // Predicated region
        $region13: #{tpu_custom_call.1} parent=11 // pred_check
          %p118 = pneg %p35
        $region14: #{tpu_custom_call.1} parent=11 // pred_check_branch
          %120 = sbr.rel (%p118) target = $region16
        $region15: #{tpu_custom_call.1} parent=11 // pred_region
          _
        $region16: #{tpu_custom_call.1} parent=11 // pred_fallthru
          _
        // Predicated region
        $region17: #{tpu_custom_call.1} parent=11 // pred_check
          %p121 = pneg %p56
        $region18: #{tpu_custom_call.1} parent=11 // pred_check_branch
          %123 = sbr.rel (%p121) target = $region20
        $region19: #{tpu_custom_call.1} parent=11 // pred_region
          _
        $region20: #{tpu_custom_call.1} parent=11 // pred_fallthru
          _
        // Predicated region
        $region21: #{tpu_custom_call.1} parent=11 // pred_check
          %p124 = pneg %p77
        $region22: #{tpu_custom_call.1} parent=11 // pred_check_branch
          %126 = sbr.rel (%p124) target = $region24
        $region23: #{tpu_custom_call.1} parent=11 // pred_region
          %s128 = ssub.s32 4480, 4480
          %129 = vsyncadd [#allocation4], %s128
          %s130 = sshll.u32 [#allocation3], 4
          %s131 = int_to_ptr.vmem [resolvable:$true] %s130
          %136 = dma.hbm_to_vmem [thread:$0]  %s2, 4480, %s131, [#allocation4], 128, 128, 8
        $region24: #{tpu_custom_call.1} parent=11 // pred_fallthru
          _
      $region12: #{tpu_custom_call.1} parent=5 // pred_fallthru
        _
      %p137 = scmp.lt.s32.totalorder %s14, 2
      // Predicated region
      $region25: #{tpu_custom_call.1} parent=5 // pred_check
        %p138 = pneg %p137
      $region26: #{tpu_custom_call.1} parent=5 // pred_check_branch
        %140 = sbr.rel (%p138) target = $region28
      $region27: #{tpu_custom_call.1} parent=5 // pred_region
        _
      $region28: #{tpu_custom_call.1} parent=5 // pred_fallthru
        _
      %p141 = scmp.le.s32.totalorder 1, %s14
      %p142 = scmp.lt.s32.totalorder %s14, 3
      %p143 = pnand %p141, %p142
      %p144 = pneg %p143
      // Predicated region
      $region29: #{tpu_custom_call.1} parent=5 // pred_check
        _
      $region30: #{tpu_custom_call.1} parent=5 // pred_check_branch
        %146 = sbr.rel (%p143) target = $region32
      $region31: #{tpu_custom_call.1} parent=5 // pred_region
        %s147 = ssub.s32 %s14, 1
        // Predicated region
        $region33: #{tpu_custom_call.1} parent=31 // pred_check
          %p148 = pneg %p77
        $region34: #{tpu_custom_call.1} parent=31 // pred_check_branch
          %150 = sbr.rel (%p148) target = $region36
        $region35: #{tpu_custom_call.1} parent=31 // pred_region
          %151 = dma.done [#allocation4], 4480
        $region36: #{tpu_custom_call.1} parent=31 // pred_fallthru
          _
        %p152 = pneg %p35
        %p153 = pneg %p32
        %p154 = pneg %p56
        %p155 = pneg %p53
        %p156 = pneg %p77
        %p157 = pneg %p74
        %p158 = pneg %p103
        %p159 = pneg %p100
        %s160 = sand.u32 %s90, 1
        %s161 = scalar_lea.sflag [#allocation5], %s160
        %s162 = sand.u32 %s90, 1
        %s163 = smul.addr %s162, 8
        %s164 = scalar_lea.vmem [#allocation6], %s163
        %s165 = sld [smem:[#allocation2]]
        %s166 = scalar_lea.vmem %s1, %s19
        %v167 = vld [vmem:[%s166] sm:$0x1]
        %v168 = vld [vmem:[#allocation3] sm:$0xff]
        %v169 = vld [vmem:[#allocation3 + $0x8] sm:$0xff]
        %v170 = vld [vmem:[#allocation3 + $0x10] sm:$0xff]
        %v171 = vld [vmem:[#allocation3 + $0x18] sm:$0xff]
        %v172 = vld [vmem:[#allocation3 + $0x20] sm:$0xff]
        %v173 = vld [vmem:[#allocation3 + $0x28] sm:$0xff]
        %v174 = vld [vmem:[#allocation3 + $0x30] sm:$0xff]
        %v175 = vld [vmem:[#allocation3 + $0x38] sm:$0xff]
        %v176 = vld [vmem:[#allocation3 + $0xe0] sm:$0xff]
        %v177 = vld [vmem:[#allocation3 + $0xe8] sm:$0xff]
        %v178 = vld [vmem:[#allocation3 + $0xf0] sm:$0xff]
        %v179 = vld [vmem:[#allocation3 + $0xf8] sm:$0xff]
        %v180 = vld [vmem:[#allocation3 + $0x100] sm:$0xff]
        %v181 = vld [vmem:[#allocation3 + $0x108] sm:$0xff]
        %v182 = vld [vmem:[#allocation3 + $0x110] sm:$0xff]
        %vm183 = vcmask 261120
        %v185 = vsel %vm183, %v167, 0
        %187 = vmatprep.subr.mxu0 0.0
        %188 = vmatpush1.msra.mxu0 0.0
        %189 = vmatprep.subr.mxu0 0.0
        %190 = vmatpush1.msra.mxu0 0.0
        %191 = vmatprep.subr.mxu0 0.0
        %192 = vmatpush1.msra.mxu0 0.0
        %193 = vmatprep.subr.mxu0 0.0
        %194 = vmatpush1.msra.mxu0 0.0
        %195 = vmatprep.subr.mxu0 0.0
        %196 = vmatpush1.msra.mxu0 0.0
        %197 = vmatprep.subr.mxu0 0.0
        %198 = vmatpush1.msra.mxu0 0.0
        %199 = vmatprep.subr.mxu0 0.0
        %200 = vmatpush1.msra.mxu0 0.0
        %201 = vmatprep.subr.mxu0 0.0
        %202 = vmatpush1.msra.mxu0 0.0
        %203 = vmatprep.subr.mxu0 0.0
        %204 = vmatpush1.msra.mxu0 0.0
        %205 = vmatprep.subr.mxu0 0.0
        %206 = vmatpush1.msra.mxu0 0.0
        %207 = vmatprep.subr.mxu0 0.0
        %208 = vmatpush1.msra.mxu0 0.0
        %209 = vmatprep.subr.mxu0 0.0
        %210 = vmatpush1.msra.mxu0 0.0
        %211 = vmatprep.subr.mxu0 0.0
        %212 = vmatpush1.msra.mxu0 %v171
        %213 = vmatprep.subr.mxu0 0.0
        %214 = vmatpush1.msra.mxu0 %v170
        %215 = vmatprep.subr.mxu0 0.0
        %216 = vmatpush1.msra.mxu0 %v169
        %217 = vmatprep.subr.mxu0 0.0
        %218 = vmatpush1.msra.mxu0 %v168
        %219 = vmatprep.subr.mxu0 0.0
        %220 = vmatpush2.msra.mxu0 0.0
        %221 = vmatprep.subr.mxu0 0.0
        %222 = vmatpush2.msra.mxu0 0.0
        %223 = vmatprep.subr.mxu0 0.0
        %224 = vmatpush2.msra.mxu0 0.0
        %225 = vmatprep.subr.mxu0 0.0
        %226 = vmatpush2.msra.mxu0 0.0
        %227 = vmatprep.subr.mxu0 0.0
        %228 = vmatpush2.msra.mxu0 0.0
        %229 = vmatprep.subr.mxu0 0.0
        %230 = vmatpush2.msra.mxu0 0.0
        %231 = vmatprep.subr.mxu0 0.0
        %232 = vmatpush2.msra.mxu0 0.0
        %233 = vmatprep.subr.mxu0 0.0
        %234 = vmatpush2.msra.mxu0 0.0
        %235 = vmatprep.subr.mxu0 0.0
        %236 = vmatpush2.msra.mxu0 0.0
        %237 = vmatprep.subr.mxu0 0.0
        %238 = vmatpush2.msra.mxu0 0.0
        %239 = vmatprep.subr.mxu0 0.0
        %240 = vmatpush2.msra.mxu0 0.0
        %241 = vmatprep.subr.mxu0 0.0
        %242 = vmatpush2.msra.mxu0 0.0
        %243 = vmatprep.subr.mxu0 0.0
        %244 = vmatpush2.msra.mxu0 0.0
        %245 = vmatprep.subr.mxu0 0.0
        %246 = vmatpush2.msra.mxu0 0.0
        %247 = vmatprep.subr.mxu0 0.0
        %248 = vmatpush2.msra.mxu0 0.0
        %249 = vmatprep.subr.mxu0 0.0
        %250 = vmatpush2.msra.mxu0 0.0
        %251 = vmatprep.mubr.f32.mxu0 0.0
        %252 = vmatmul.mubr.f32.gmra.mxu0 %v185
        %v253 = vpop.f32.mrf.mxu0
        %v254 = vadd.f32 %v182, %v253
        %v255 = vpop.f32.mrf.mxu0
        %256 = vdwg.mxu0
        %v257 = vmax.f32 %v254, 0.0
        %262 = vrot.lane.b32.xlu0 %v168, 96
        %v263 = vpop.permute.xlu0 %262
        %264 = vrot.lane.b32.xlu0 %v169, 96
        %v265 = vpop.permute.xlu0 %264
        %266 = vrot.lane.b32.xlu0 %v170, 96
        %v267 = vpop.permute.xlu0 %266
        %268 = vrot.lane.b32.xlu0 %v171, 96
        %v269 = vpop.permute.xlu0 %268
        %275 = vrot.lane.b32.xlu0 %v182, 96
        %v276 = vpop.permute.xlu0 %275
        %v279 = vsel %vm183, %v257, 0
        %281 = vmatprep.subr.mxu0 0.0
        %282 = vmatpush1.msra.mxu0 0.0
        %283 = vmatprep.subr.mxu0 0.0
        %284 = vmatpush1.msra.mxu0 0.0
        %285 = vmatprep.subr.mxu0 0.0
        %286 = vmatpush1.msra.mxu0 0.0
        %287 = vmatprep.subr.mxu0 0.0
        %288 = vmatpush1.msra.mxu0 0.0
        %289 = vmatprep.subr.mxu0 0.0
        %290 = vmatpush1.msra.mxu0 0.0
        %291 = vmatprep.subr.mxu0 0.0
        %292 = vmatpush1.msra.mxu0 0.0
        %293 = vmatprep.subr.mxu0 0.0
        %294 = vmatpush1.msra.mxu0 0.0
        %295 = vmatprep.subr.mxu0 0.0
        %296 = vmatpush1.msra.mxu0 0.0
        %297 = vmatprep.subr.mxu0 0.0
        %298 = vmatpush1.msra.mxu0 0.0
        %299 = vmatprep.subr.mxu0 0.0
        %300 = vmatpush1.msra.mxu0 0.0
        %301 = vmatprep.subr.mxu0 0.0
        %302 = vmatpush1.msra.mxu0 0.0
        %303 = vmatprep.subr.mxu0 0.0
        %304 = vmatpush1.msra.mxu0 0.0
        %305 = vmatprep.subr.mxu0 0.0
        %306 = vmatpush1.msra.mxu0 %v269
        %307 = vmatprep.subr.mxu0 0.0
        %308 = vmatpush1.msra.mxu0 %v267
        %309 = vmatprep.subr.mxu0 0.0
        %310 = vmatpush1.msra.mxu0 %v265
        %311 = vmatprep.subr.mxu0 0.0
        %312 = vmatpush1.msra.mxu0 %v263
        %313 = vmatprep.subr.mxu0 0.0
        %314 = vmatpush2.msra.mxu0 0.0
        %315 = vmatprep.subr.mxu0 0.0
        %316 = vmatpush2.msra.mxu0 0.0
        %317 = vmatprep.subr.mxu0 0.0
        %318 = vmatpush2.msra.mxu0 0.0
        %319 = vmatprep.subr.mxu0 0.0
        %320 = vmatpush2.msra.mxu0 0.0
        %321 = vmatprep.subr.mxu0 0.0
        %322 = vmatpush2.msra.mxu0 0.0
        %323 = vmatprep.subr.mxu0 0.0
        %324 = vmatpush2.msra.mxu0 0.0
        %325 = vmatprep.subr.mxu0 0.0
        %326 = vmatpush2.msra.mxu0 0.0
        %327 = vmatprep.subr.mxu0 0.0
        %328 = vmatpush2.msra.mxu0 0.0
        %329 = vmatprep.subr.mxu0 0.0
        %330 = vmatpush2.msra.mxu0 0.0
        %331 = vmatprep.subr.mxu0 0.0
        %332 = vmatpush2.msra.mxu0 0.0
        %333 = vmatprep.subr.mxu0 0.0
        %334 = vmatpush2.msra.mxu0 0.0
        %335 = vmatprep.subr.mxu0 0.0
        %336 = vmatpush2.msra.mxu0 0.0
        %337 = vmatprep.subr.mxu0 0.0
        %338 = vmatpush2.msra.mxu0 0.0
        %339 = vmatprep.subr.mxu0 0.0
        %340 = vmatpush2.msra.mxu0 0.0
        %341 = vmatprep.subr.mxu0 0.0
        %342 = vmatpush2.msra.mxu0 0.0
        %343 = vmatprep.subr.mxu0 0.0
        %344 = vmatpush2.msra.mxu0 0.0
        %345 = vmatprep.mubr.f32.mxu0 0.0
        %346 = vmatmul.mubr.f32.gmra.mxu0 %v279
        %v347 = vpop.f32.mrf.mxu0
        %v348 = vadd.f32 %v276, %v347
        %v349 = vpop.f32.mrf.mxu0
        %350 = vdwg.mxu0
        %v351 = vmax.f32 %v348, 0.0
        %352 = vrot.lane.b32.xlu0 %v168, 64
        %v353 = vpop.permute.xlu0 %352
        %354 = vrot.lane.b32.xlu0 %v169, 64
        %v355 = vpop.permute.xlu0 %354
        %356 = vrot.lane.b32.xlu0 %v170, 64
        %v357 = vpop.permute.xlu0 %356
        %358 = vrot.lane.b32.xlu0 %v171, 64
        %v359 = vpop.permute.xlu0 %358
        %364 = vrot.lane.b32.xlu0 %v182, 64
        %v365 = vpop.permute.xlu0 %364
        %v368 = vsel %vm183, %v351, 0
        %370 = vmatprep.subr.mxu0 0.0
        %371 = vmatpush1.msra.mxu0 0.0
        %372 = vmatprep.subr.mxu0 0.0
        %373 = vmatpush1.msra.mxu0 0.0
        %374 = vmatprep.subr.mxu0 0.0
        %375 = vmatpush1.msra.mxu0 0.0
        %376 = vmatprep.subr.mxu0 0.0
        %377 = vmatpush1.msra.mxu0 0.0
        %378 = vmatprep.subr.mxu0 0.0
        %379 = vmatpush1.msra.mxu0 0.0
        %380 = vmatprep.subr.mxu0 0.0
        %381 = vmatpush1.msra.mxu0 0.0
        %382 = vmatprep.subr.mxu0 0.0
        %383 = vmatpush1.msra.mxu0 0.0
        %384 = vmatprep.subr.mxu0 0.0
        %385 = vmatpush1.msra.mxu0 0.0
        %386 = vmatprep.subr.mxu0 0.0
        %387 = vmatpush1.msra.mxu0 0.0
        %388 = vmatprep.subr.mxu0 0.0
        %389 = vmatpush1.msra.mxu0 0.0
        %390 = vmatprep.subr.mxu0 0.0
        %391 = vmatpush1.msra.mxu0 0.0
        %392 = vmatprep.subr.mxu0 0.0
        %393 = vmatpush1.msra.mxu0 0.0
        %394 = vmatprep.subr.mxu0 0.0
        %395 = vmatpush1.msra.mxu0 %v359
        %396 = vmatprep.subr.mxu0 0.0
        %397 = vmatpush1.msra.mxu0 %v357
        %398 = vmatprep.subr.mxu0 0.0
        %399 = vmatpush1.msra.mxu0 %v355
        %400 = vmatprep.subr.mxu0 0.0
        %401 = vmatpush1.msra.mxu0 %v353
        %402 = vmatprep.subr.mxu0 0.0
        %403 = vmatpush2.msra.mxu0 0.0
        %404 = vmatprep.subr.mxu0 0.0
        %405 = vmatpush2.msra.mxu0 0.0
        %406 = vmatprep.subr.mxu0 0.0
        %407 = vmatpush2.msra.mxu0 0.0
        %408 = vmatprep.subr.mxu0 0.0
        %409 = vmatpush2.msra.mxu0 0.0
        %410 = vmatprep.subr.mxu0 0.0
        %411 = vmatpush2.msra.mxu0 0.0
        %412 = vmatprep.subr.mxu0 0.0
        %413 = vmatpush2.msra.mxu0 0.0
        %414 = vmatprep.subr.mxu0 0.0
        %415 = vmatpush2.msra.mxu0 0.0
        %416 = vmatprep.subr.mxu0 0.0
        %417 = vmatpush2.msra.mxu0 0.0
        %418 = vmatprep.subr.mxu0 0.0
        %419 = vmatpush2.msra.mxu0 0.0
        %420 = vmatprep.subr.mxu0 0.0
        %421 = vmatpush2.msra.mxu0 0.0
        %422 = vmatprep.subr.mxu0 0.0
        %423 = vmatpush2.msra.mxu0 0.0
        %424 = vmatprep.subr.mxu0 0.0
        %425 = vmatpush2.msra.mxu0 0.0
        %426 = vmatprep.subr.mxu0 0.0
        %427 = vmatpush2.msra.mxu0 0.0
        %428 = vmatprep.subr.mxu0 0.0
        %429 = vmatpush2.msra.mxu0 0.0
        %430 = vmatprep.subr.mxu0 0.0
        %431 = vmatpush2.msra.mxu0 0.0
        %432 = vmatprep.subr.mxu0 0.0
        %433 = vmatpush2.msra.mxu0 0.0
        %434 = vmatprep.mubr.f32.mxu0 0.0
        %435 = vmatmul.mubr.f32.gmra.mxu0 %v368
        %v436 = vpop.f32.mrf.mxu0
        %v437 = vadd.f32 %v365, %v436
        %v438 = vpop.f32.mrf.mxu0
        %439 = vdwg.mxu0
        %v440 = vlaneseq
        %v441 = vand.u32 %v440, 127
        %v442 = vcvt.s32.f32 %v441
        %vm443 = vcmp.lt.f32.partialorder %v442, 8.0
        %v444 = vsel %vm443, %v437, -1e+30
        %vm445 = vcmask 253952
        %v446 = vsel %vm445, %v444, -inf
        %447 = vmax.xlane.f32.xlu0 %v446
        %v448 = vpop.xlane.xlu0 %447
        %v449 = vsub.f32 %v444, %v448
        %v450 = vmul.f32 %v449, 1.442695
        %v451 = vpow.pop %v450
        %v452 = vsel %vm443, %v451, 0.0
        %v453 = vsel %vm445, %v452, 0.0
        %454 = vadd.xlane.f32.xlu0 %v453
        %v455 = vpop.xlane.xlu0 %454
        %v456 = vrcp.pop %v455
        %v457 = vmul.f32 %v452, %v456
        %s458 = ssub.f32 1.0, %s165
        %v459 = vstv %s458
        %v460 = vmul.f32 %v457, %v459
        %v461 = vrcp.pop 8.0
        %s462 = vtos %v461
        %s463 = smul.f32 %s165, %s462
        %v464 = vstv %s463
        %v465 = vadd.f32 %v460, %v464
        %v466 = vsel %vm443, %v465, 0.0
        %v467 = vsel %vm445, %v466, -inf
        %468 = vmax.xlane.f32.xlu0 %v467
        %v469 = vpop.xlane.xlu0 %468
        %vm470 = vcmp.ge.f32.partialorder %v466, %v469
        %v471 = vsel %vm470, %v441, 32
        %v472 = vsel %vm445, %v471, 2147483647
        %v473 = vand.u32 %v472, 65535
        %v474 = vshra.s32 %v472, 16
        %v475 = vcvt.s32.f32 %v473
        %v476 = vcvt.s32.f32 %v474
        %477 = vmin.xlane.f32.xlu0 %v476
        %v478 = vpop.xlane.xlu0 %477
        %vm479 = vcmp.eq.f32.partialorder %v476, %v478
        %v480 = vsel %vm479, %v475, inf
        %481 = vmin.xlane.f32.xlu0 %v480
        %v482 = vpop.xlane.xlu0 %481
        %v483 = vcvt.f32.s32 %v482
        %v484 = vcvt.f32.s32 %v478
        %v485 = vshll.u32 %v484, 16
        %v486 = vadd.s32 %v485, %v483
        %vm487 = vcmp.eq.s32.totalorder %v441, %v486
        %v488 = vsel %vm487, %v466, 0.0
        %v489 = vsel %vm445, %v488, 0.0
        %490 = vadd.xlane.f32.xlu0 %v489
        %v491 = vpop.xlane.xlu0 %490
        %v492 = vsel %vm487, 1, 0
        %v493 = vcvt.s32.f32 %v492
        %vm494 = vcmask 130048
        %v496 = vsel %vm494, %v493, 0
        %498 = vmatprep.subr.mxu0 0.0
        %499 = vmatpush1.msra.mxu0 0.0
        %500 = vmatprep.subr.mxu0 0.0
        %501 = vmatpush1.msra.mxu0 0.0
        %502 = vmatprep.subr.mxu0 0.0
        %503 = vmatpush1.msra.mxu0 0.0
        %504 = vmatprep.subr.mxu0 0.0
        %505 = vmatpush1.msra.mxu0 0.0
        %506 = vmatprep.subr.mxu0 0.0
        %507 = vmatpush1.msra.mxu0 0.0
        %508 = vmatprep.subr.mxu0 0.0
        %509 = vmatpush1.msra.mxu0 0.0
        %510 = vmatprep.subr.mxu0 0.0
        %511 = vmatpush1.msra.mxu0 0.0
        %512 = vmatprep.subr.mxu0 0.0
        %513 = vmatpush1.msra.mxu0 0.0
        %514 = vmatprep.subr.mxu0 0.0
        %515 = vmatpush1.msra.mxu0 0.0
        %516 = vmatprep.subr.mxu0 0.0
        %517 = vmatpush1.msra.mxu0 0.0
        %518 = vmatprep.subr.mxu0 0.0
        %519 = vmatpush1.msra.mxu0 0.0
        %520 = vmatprep.subr.mxu0 0.0
        %521 = vmatpush1.msra.mxu0 0.0
        %522 = vmatprep.subr.mxu0 0.0
        %523 = vmatpush1.msra.mxu0 0.0
        %524 = vmatprep.subr.mxu0 0.0
        %525 = vmatpush1.msra.mxu0 0.0
        %526 = vmatprep.subr.mxu0 0.0
        %527 = vmatpush1.msra.mxu0 %v181
        %528 = vmatprep.subr.mxu0 0.0
        %529 = vmatpush1.msra.mxu0 %v180
        %530 = vmatprep.subr.mxu0 0.0
        %531 = vmatpush2.msra.mxu0 0.0
        %532 = vmatprep.subr.mxu0 0.0
        %533 = vmatpush2.msra.mxu0 0.0
        %534 = vmatprep.subr.mxu0 0.0
        %535 = vmatpush2.msra.mxu0 0.0
        %536 = vmatprep.subr.mxu0 0.0
        %537 = vmatpush2.msra.mxu0 0.0
        %538 = vmatprep.subr.mxu0 0.0
        %539 = vmatpush2.msra.mxu0 0.0
        %540 = vmatprep.subr.mxu0 0.0
        %541 = vmatpush2.msra.mxu0 0.0
        %542 = vmatprep.subr.mxu0 0.0
        %543 = vmatpush2.msra.mxu0 0.0
        %544 = vmatprep.subr.mxu0 0.0
        %545 = vmatpush2.msra.mxu0 0.0
        %546 = vmatprep.subr.mxu0 0.0
        %547 = vmatpush2.msra.mxu0 0.0
        %548 = vmatprep.subr.mxu0 0.0
        %549 = vmatpush2.msra.mxu0 0.0
        %550 = vmatprep.subr.mxu0 0.0
        %551 = vmatpush2.msra.mxu0 0.0
        %552 = vmatprep.subr.mxu0 0.0
        %553 = vmatpush2.msra.mxu0 0.0
        %554 = vmatprep.subr.mxu0 0.0
        %555 = vmatpush2.msra.mxu0 0.0
        %556 = vmatprep.subr.mxu0 0.0
        %557 = vmatpush2.msra.mxu0 0.0
        %558 = vmatprep.subr.mxu0 0.0
        %559 = vmatpush2.msra.mxu0 0.0
        %560 = vmatprep.subr.mxu0 0.0
        %561 = vmatpush2.msra.mxu0 0.0
        %562 = vmatprep.mubr.f32.mxu0 0.0
        %563 = vmatmul.mubr.f32.gmra.mxu0 %v496
        %v564 = vpop.f32.mrf.mxu0
        %v565 = vadd.f32 0.0, %v564
        %v566 = vpop.f32.mrf.mxu0
        %567 = vdwg.mxu0
        %v568 = vrot.slane %v182, 7
        %570 = vmatprep.subr.mxu0 0.0
        %571 = vmatpush1.msra.mxu0 0.0
        %572 = vmatprep.subr.mxu0 0.0
        %573 = vmatpush1.msra.mxu0 0.0
        %574 = vmatprep.subr.mxu0 0.0
        %575 = vmatpush1.msra.mxu0 0.0
        %576 = vmatprep.subr.mxu0 0.0
        %577 = vmatpush1.msra.mxu0 0.0
        %578 = vmatprep.subr.mxu0 0.0
        %579 = vmatpush1.msra.mxu0 0.0
        %580 = vmatprep.subr.mxu0 0.0
        %581 = vmatpush1.msra.mxu0 0.0
        %582 = vmatprep.subr.mxu0 0.0
        %583 = vmatpush1.msra.mxu0 0.0
        %584 = vmatprep.subr.mxu0 0.0
        %585 = vmatpush1.msra.mxu0 0.0
        %586 = vmatprep.subr.mxu0 0.0
        %587 = vmatpush1.msra.mxu0 0.0
        %588 = vmatprep.subr.mxu0 0.0
        %589 = vmatpush1.msra.mxu0 0.0
        %590 = vmatprep.subr.mxu0 0.0
        %591 = vmatpush1.msra.mxu0 0.0
        %592 = vmatprep.subr.mxu0 0.0
        %593 = vmatpush1.msra.mxu0 0.0
        %594 = vmatprep.subr.mxu0 0.0
        %595 = vmatpush1.msra.mxu0 %v179
        %596 = vmatprep.subr.mxu0 0.0
        %597 = vmatpush1.msra.mxu0 %v178
        %598 = vmatprep.subr.mxu0 0.0
        %599 = vmatpush1.msra.mxu0 %v177
        %600 = vmatprep.subr.mxu0 0.0
        %601 = vmatpush1.msra.mxu0 %v176
        %602 = vmatprep.subr.mxu0 0.0
        %603 = vmatpush2.msra.mxu0 0.0
        %604 = vmatprep.subr.mxu0 0.0
        %605 = vmatpush2.msra.mxu0 0.0
        %606 = vmatprep.subr.mxu0 0.0
        %607 = vmatpush2.msra.mxu0 0.0
        %608 = vmatprep.subr.mxu0 0.0
        %609 = vmatpush2.msra.mxu0 0.0
        %610 = vmatprep.subr.mxu0 0.0
        %611 = vmatpush2.msra.mxu0 0.0
        %612 = vmatprep.subr.mxu0 0.0
        %613 = vmatpush2.msra.mxu0 0.0
        %614 = vmatprep.subr.mxu0 0.0
        %615 = vmatpush2.msra.mxu0 0.0
        %616 = vmatprep.subr.mxu0 0.0
        %617 = vmatpush2.msra.mxu0 0.0
        %618 = vmatprep.subr.mxu0 0.0
        %619 = vmatpush2.msra.mxu0 0.0
        %620 = vmatprep.subr.mxu0 0.0
        %621 = vmatpush2.msra.mxu0 0.0
        %622 = vmatprep.subr.mxu0 0.0
        %623 = vmatpush2.msra.mxu0 0.0
        %624 = vmatprep.subr.mxu0 0.0
        %625 = vmatpush2.msra.mxu0 0.0
        %626 = vmatprep.subr.mxu0 0.0
        %627 = vmatpush2.msra.mxu0 0.0
        %628 = vmatprep.subr.mxu0 0.0
        %629 = vmatpush2.msra.mxu0 0.0
        %630 = vmatprep.subr.mxu0 0.0
        %631 = vmatpush2.msra.mxu0 0.0
        %632 = vmatprep.subr.mxu0 0.0
        %633 = vmatpush2.msra.mxu0 0.0
        %634 = vmatprep.mubr.f32.mxu0 0.0
        %635 = vmatmul.mubr.f32.gmra.mxu0 %v185
        %v636 = vpop.f32.mrf.mxu0
        %v637 = vadd.f32 %v568, %v636
        %v638 = vpop.f32.mrf.mxu0
        %639 = vdwg.mxu0
        %v640 = vadd.f32 %v565, %v637
        %v641 = vxor.u32 %v640, 2147483648
        %v642 = vmul.f32 %v641, 1.442695
        %v643 = vpow.pop %v642
        %v644 = vadd.f32 %v643, 1.0
        %v645 = vrcp.pop %v644
        %v646 = vmul.f32 1.0, %v645
        %648 = vrot.lane.b32.xlu0 %v637, 64
        %v649 = vpop.permute.xlu0 %648
        %v651 = vmul.f32 %v646, %v649
        %653 = vrot.lane.b32.xlu0 %v651, 64
        %v654 = vpop.permute.xlu0 %653
        %v656 = vadd.f32 %v565, %v654
        %v657 = vtanh.pop %v656
        %v658 = vsub.f32 1.0, %v646
        %660 = vrot.lane.b32.xlu0 %v657, 96
        %v661 = vpop.permute.xlu0 %660
        %v663 = vmul.f32 %v658, %v661
        %664 = vrot.lane.b32.xlu0 %v167, 32
        %v665 = vpop.permute.xlu0 %664
        %v667 = vmul.f32 %v646, %v665
        %v668 = vadd.f32 %v663, %v667
        %670 = vrot.lane.b32.xlu0 %v668, 96
        %v671 = vpop.permute.xlu0 %670
        %v672 = vrot.slane %v182, 1
        %v674 = vsel %vm183, %v671, 0
        %676 = vmatprep.subr.mxu0 0.0
        %677 = vmatpush1.msra.mxu0 0.0
        %678 = vmatprep.subr.mxu0 0.0
        %679 = vmatpush1.msra.mxu0 0.0
        %680 = vmatprep.subr.mxu0 0.0
        %681 = vmatpush1.msra.mxu0 0.0
        %682 = vmatprep.subr.mxu0 0.0
        %683 = vmatpush1.msra.mxu0 0.0
        %684 = vmatprep.subr.mxu0 0.0
        %685 = vmatpush1.msra.mxu0 0.0
        %686 = vmatprep.subr.mxu0 0.0
        %687 = vmatpush1.msra.mxu0 0.0
        %688 = vmatprep.subr.mxu0 0.0
        %689 = vmatpush1.msra.mxu0 0.0
        %690 = vmatprep.subr.mxu0 0.0
        %691 = vmatpush1.msra.mxu0 0.0
        %692 = vmatprep.subr.mxu0 0.0
        %693 = vmatpush1.msra.mxu0 0.0
        %694 = vmatprep.subr.mxu0 0.0
        %695 = vmatpush1.msra.mxu0 0.0
        %696 = vmatprep.subr.mxu0 0.0
        %697 = vmatpush1.msra.mxu0 0.0
        %698 = vmatprep.subr.mxu0 0.0
        %699 = vmatpush1.msra.mxu0 0.0
        %700 = vmatprep.subr.mxu0 0.0
        %701 = vmatpush1.msra.mxu0 %v175
        %702 = vmatprep.subr.mxu0 0.0
        %703 = vmatpush1.msra.mxu0 %v174
        %704 = vmatprep.subr.mxu0 0.0
        %705 = vmatpush1.msra.mxu0 %v173
        %706 = vmatprep.subr.mxu0 0.0
        %707 = vmatpush1.msra.mxu0 %v172
        %708 = vmatprep.subr.mxu0 0.0
        %709 = vmatpush2.msra.mxu0 0.0
        %710 = vmatprep.subr.mxu0 0.0
        %711 = vmatpush2.msra.mxu0 0.0
        %712 = vmatprep.subr.mxu0 0.0
        %713 = vmatpush2.msra.mxu0 0.0
        %714 = vmatprep.subr.mxu0 0.0
        %715 = vmatpush2.msra.mxu0 0.0
        %716 = vmatprep.subr.mxu0 0.0
        %717 = vmatpush2.msra.mxu0 0.0
        %718 = vmatprep.subr.mxu0 0.0
        %719 = vmatpush2.msra.mxu0 0.0
        %720 = vmatprep.subr.mxu0 0.0
        %721 = vmatpush2.msra.mxu0 0.0
        %722 = vmatprep.subr.mxu0 0.0
        %723 = vmatpush2.msra.mxu0 0.0
        %724 = vmatprep.subr.mxu0 0.0
        %725 = vmatpush2.msra.mxu0 0.0
        %726 = vmatprep.subr.mxu0 0.0
        %727 = vmatpush2.msra.mxu0 0.0
        %728 = vmatprep.subr.mxu0 0.0
        %729 = vmatpush2.msra.mxu0 0.0
        %730 = vmatprep.subr.mxu0 0.0
        %731 = vmatpush2.msra.mxu0 0.0
        %732 = vmatprep.subr.mxu0 0.0
        %733 = vmatpush2.msra.mxu0 0.0
        %734 = vmatprep.subr.mxu0 0.0
        %735 = vmatpush2.msra.mxu0 0.0
        %736 = vmatprep.subr.mxu0 0.0
        %737 = vmatpush2.msra.mxu0 0.0
        %738 = vmatprep.subr.mxu0 0.0
        %739 = vmatpush2.msra.mxu0 0.0
        %740 = vmatprep.mubr.f32.mxu0 0.0
        %741 = vmatmul.mubr.f32.gmra.mxu0 %v674
        %v742 = vpop.f32.mrf.mxu0
        %v743 = vadd.f32 %v672, %v742
        %v744 = vpop.f32.mrf.mxu0
        %745 = vdwg.mxu0
        %v746 = vmax.f32 %v743, 0.0
        %751 = vrot.lane.b32.xlu0 %v172, 96
        %v752 = vpop.permute.xlu0 %751
        %753 = vrot.lane.b32.xlu0 %v173, 96
        %v754 = vpop.permute.xlu0 %753
        %755 = vrot.lane.b32.xlu0 %v174, 96
        %v756 = vpop.permute.xlu0 %755
        %757 = vrot.lane.b32.xlu0 %v175, 96
        %v758 = vpop.permute.xlu0 %757
        %763 = vrot.lane.b32.xlu0 %v672, 96
        %v764 = vpop.permute.xlu0 %763
        %v767 = vsel %vm183, %v746, 0
        %769 = vmatprep.subr.mxu0 0.0
        %770 = vmatpush1.msra.mxu0 0.0
        %771 = vmatprep.subr.mxu0 0.0
        %772 = vmatpush1.msra.mxu0 0.0
        %773 = vmatprep.subr.mxu0 0.0
        %774 = vmatpush1.msra.mxu0 0.0
        %775 = vmatprep.subr.mxu0 0.0
        %776 = vmatpush1.msra.mxu0 0.0
        %777 = vmatprep.subr.mxu0 0.0
        %778 = vmatpush1.msra.mxu0 0.0
        %779 = vmatprep.subr.mxu0 0.0
        %780 = vmatpush1.msra.mxu0 0.0
        %781 = vmatprep.subr.mxu0 0.0
        %782 = vmatpush1.msra.mxu0 0.0
        %783 = vmatprep.subr.mxu0 0.0
        %784 = vmatpush1.msra.mxu0 0.0
        %785 = vmatprep.subr.mxu0 0.0
        %786 = vmatpush1.msra.mxu0 0.0
        %787 = vmatprep.subr.mxu0 0.0
        %788 = vmatpush1.msra.mxu0 0.0
        %789 = vmatprep.subr.mxu0 0.0
        %790 = vmatpush1.msra.mxu0 0.0
        %791 = vmatprep.subr.mxu0 0.0
        %792 = vmatpush1.msra.mxu0 0.0
        %793 = vmatprep.subr.mxu0 0.0
        %794 = vmatpush1.msra.mxu0 %v758
        %795 = vmatprep.subr.mxu0 0.0
        %796 = vmatpush1.msra.mxu0 %v756
        %797 = vmatprep.subr.mxu0 0.0
        %798 = vmatpush1.msra.mxu0 %v754
        %799 = vmatprep.subr.mxu0 0.0
        %800 = vmatpush1.msra.mxu0 %v752
        %801 = vmatprep.subr.mxu0 0.0
        %802 = vmatpush2.msra.mxu0 0.0
        %803 = vmatprep.subr.mxu0 0.0
        %804 = vmatpush2.msra.mxu0 0.0
        %805 = vmatprep.subr.mxu0 0.0
        %806 = vmatpush2.msra.mxu0 0.0
        %807 = vmatprep.subr.mxu0 0.0
        %808 = vmatpush2.msra.mxu0 0.0
        %809 = vmatprep.subr.mxu0 0.0
        %810 = vmatpush2.msra.mxu0 0.0
        %811 = vmatprep.subr.mxu0 0.0
        %812 = vmatpush2.msra.mxu0 0.0
        %813 = vmatprep.subr.mxu0 0.0
        %814 = vmatpush2.msra.mxu0 0.0
        %815 = vmatprep.subr.mxu0 0.0
        %816 = vmatpush2.msra.mxu0 0.0
        %817 = vmatprep.subr.mxu0 0.0
        %818 = vmatpush2.msra.mxu0 0.0
        %819 = vmatprep.subr.mxu0 0.0
        %820 = vmatpush2.msra.mxu0 0.0
        %821 = vmatprep.subr.mxu0 0.0
        %822 = vmatpush2.msra.mxu0 0.0
        %823 = vmatprep.subr.mxu0 0.0
        %824 = vmatpush2.msra.mxu0 0.0
        %825 = vmatprep.subr.mxu0 0.0
        %826 = vmatpush2.msra.mxu0 0.0
        %827 = vmatprep.subr.mxu0 0.0
        %828 = vmatpush2.msra.mxu0 0.0
        %829 = vmatprep.subr.mxu0 0.0
        %830 = vmatpush2.msra.mxu0 0.0
        %831 = vmatprep.subr.mxu0 0.0
        %832 = vmatpush2.msra.mxu0 0.0
        %833 = vmatprep.mubr.f32.mxu0 0.0
        %834 = vmatmul.mubr.f32.gmra.mxu0 %v767
        %v835 = vpop.f32.mrf.mxu0
        %v836 = vadd.f32 %v764, %v835
        %v837 = vpop.f32.mrf.mxu0
        %838 = vdwg.mxu0
        %v839 = vmax.f32 %v836, 0.0
        %840 = vrot.lane.b32.xlu0 %v172, 64
        %v841 = vpop.permute.xlu0 %840
        %842 = vrot.lane.b32.xlu0 %v173, 64
        %v843 = vpop.permute.xlu0 %842
        %844 = vrot.lane.b32.xlu0 %v174, 64
        %v845 = vpop.permute.xlu0 %844
        %846 = vrot.lane.b32.xlu0 %v175, 64
        %v847 = vpop.permute.xlu0 %846
        %852 = vrot.lane.b32.xlu0 %v672, 64
        %v853 = vpop.permute.xlu0 %852
        %v856 = vsel %vm183, %v839, 0
        %858 = vmatprep.subr.mxu0 0.0
        %859 = vmatpush1.msra.mxu0 0.0
        %860 = vmatprep.subr.mxu0 0.0
        %861 = vmatpush1.msra.mxu0 0.0
        %862 = vmatprep.subr.mxu0 0.0
        %863 = vmatpush1.msra.mxu0 0.0
        %864 = vmatprep.subr.mxu0 0.0
        %865 = vmatpush1.msra.mxu0 0.0
        %866 = vmatprep.subr.mxu0 0.0
        %867 = vmatpush1.msra.mxu0 0.0
        %868 = vmatprep.subr.mxu0 0.0
        %869 = vmatpush1.msra.mxu0 0.0
        %870 = vmatprep.subr.mxu0 0.0
        %871 = vmatpush1.msra.mxu0 0.0
        %872 = vmatprep.subr.mxu0 0.0
        %873 = vmatpush1.msra.mxu0 0.0
        %874 = vmatprep.subr.mxu0 0.0
        %875 = vmatpush1.msra.mxu0 0.0
        %876 = vmatprep.subr.mxu0 0.0
        %877 = vmatpush1.msra.mxu0 0.0
        %878 = vmatprep.subr.mxu0 0.0
        %879 = vmatpush1.msra.mxu0 0.0
        %880 = vmatprep.subr.mxu0 0.0
        %881 = vmatpush1.msra.mxu0 0.0
        %882 = vmatprep.subr.mxu0 0.0
        %883 = vmatpush1.msra.mxu0 %v847
        %884 = vmatprep.subr.mxu0 0.0
        %885 = vmatpush1.msra.mxu0 %v845
        %886 = vmatprep.subr.mxu0 0.0
        %887 = vmatpush1.msra.mxu0 %v843
        %888 = vmatprep.subr.mxu0 0.0
        %889 = vmatpush1.msra.mxu0 %v841
        %890 = vmatprep.subr.mxu0 0.0
        %891 = vmatpush2.msra.mxu0 0.0
        %892 = vmatprep.subr.mxu0 0.0
        %893 = vmatpush2.msra.mxu0 0.0
        %894 = vmatprep.subr.mxu0 0.0
        %895 = vmatpush2.msra.mxu0 0.0
        %896 = vmatprep.subr.mxu0 0.0
        %897 = vmatpush2.msra.mxu0 0.0
        %898 = vmatprep.subr.mxu0 0.0
        %899 = vmatpush2.msra.mxu0 0.0
        %900 = vmatprep.subr.mxu0 0.0
        %901 = vmatpush2.msra.mxu0 0.0
        %902 = vmatprep.subr.mxu0 0.0
        %903 = vmatpush2.msra.mxu0 0.0
        %904 = vmatprep.subr.mxu0 0.0
        %905 = vmatpush2.msra.mxu0 0.0
        %906 = vmatprep.subr.mxu0 0.0
        %907 = vmatpush2.msra.mxu0 0.0
        %908 = vmatprep.subr.mxu0 0.0
        %909 = vmatpush2.msra.mxu0 0.0
        %910 = vmatprep.subr.mxu0 0.0
        %911 = vmatpush2.msra.mxu0 0.0
        %912 = vmatprep.subr.mxu0 0.0
        %913 = vmatpush2.msra.mxu0 0.0
        %914 = vmatprep.subr.mxu0 0.0
        %915 = vmatpush2.msra.mxu0 0.0
        %916 = vmatprep.subr.mxu0 0.0
        %917 = vmatpush2.msra.mxu0 0.0
        %918 = vmatprep.subr.mxu0 0.0
        %919 = vmatpush2.msra.mxu0 0.0
        %920 = vmatprep.subr.mxu0 0.0
        %921 = vmatpush2.msra.mxu0 0.0
        %922 = vmatprep.mubr.f32.mxu0 0.0
        %923 = vmatmul.mubr.f32.gmra.mxu0 %v856
        %v924 = vpop.f32.mrf.mxu0
        %v925 = vadd.f32 %v853, %v924
        %v926 = vpop.f32.mrf.mxu0
        %927 = vdwg.mxu0
        %v928 = vsel %vm443, %v925, -1e+30
        %v929 = vsel %vm445, %v928, -inf
        %930 = vmax.xlane.f32.xlu0 %v929
        %v931 = vpop.xlane.xlu0 %930
        %v932 = vsub.f32 %v928, %v931
        %v933 = vmul.f32 %v932, 1.442695
        %v934 = vpow.pop %v933
        %v935 = vsel %vm443, %v934, 0.0
        %v936 = vsel %vm445, %v935, 0.0
        %937 = vadd.xlane.f32.xlu0 %v936
        %v938 = vpop.xlane.xlu0 %937
        %v939 = vrcp.pop %v938
        %v940 = vmul.f32 %v935, %v939
        %v941 = vmul.f32 %v940, %v459
        %v942 = vadd.f32 %v941, %v464
        %v943 = vsel %vm443, %v942, 0.0
        %v944 = vsel %vm445, %v943, -inf
        %945 = vmax.xlane.f32.xlu0 %v944
        %v946 = vpop.xlane.xlu0 %945
        %vm947 = vcmp.ge.f32.partialorder %v943, %v946
        %v948 = vsel %vm947, %v441, 32
        %v949 = vsel %vm445, %v948, 2147483647
        %v950 = vand.u32 %v949, 65535
        %v951 = vshra.s32 %v949, 16
        %v952 = vcvt.s32.f32 %v950
        %v953 = vcvt.s32.f32 %v951
        %954 = vmin.xlane.f32.xlu0 %v953
        %v955 = vpop.xlane.xlu0 %954
        %vm956 = vcmp.eq.f32.partialorder %v953, %v955
        %v957 = vsel %vm956, %v952, inf
        %958 = vmin.xlane.f32.xlu0 %v957
        %v959 = vpop.xlane.xlu0 %958
        %v960 = vcvt.f32.s32 %v959
        %v961 = vcvt.f32.s32 %v955
        %v962 = vshll.u32 %v961, 16
        %v963 = vadd.s32 %v962, %v960
        %vm964 = vcmp.eq.s32.totalorder %v441, %v963
        %v965 = vsel %vm964, %v943, 0.0
        %v966 = vsel %vm445, %v965, 0.0
        %967 = vadd.xlane.f32.xlu0 %v966
        %v968 = vpop.xlane.xlu0 %967
        %v969 = vadd.s32 %v963, 8
        %vm970 = vcmp.eq.s32.totalorder %v441, %v969
        %v971 = vsel %vm970, 1, 0
        %v972 = vcvt.s32.f32 %v971
        %v974 = vsel %vm494, %v972, 0
        %976 = vmatprep.subr.mxu0 0.0
        %977 = vmatpush1.msra.mxu0 0.0
        %978 = vmatprep.subr.mxu0 0.0
        %979 = vmatpush1.msra.mxu0 0.0
        %980 = vmatprep.subr.mxu0 0.0
        %981 = vmatpush1.msra.mxu0 0.0
        %982 = vmatprep.subr.mxu0 0.0
        %983 = vmatpush1.msra.mxu0 0.0
        %984 = vmatprep.subr.mxu0 0.0
        %985 = vmatpush1.msra.mxu0 0.0
        %986 = vmatprep.subr.mxu0 0.0
        %987 = vmatpush1.msra.mxu0 0.0
        %988 = vmatprep.subr.mxu0 0.0
        %989 = vmatpush1.msra.mxu0 0.0
        %990 = vmatprep.subr.mxu0 0.0
        %991 = vmatpush1.msra.mxu0 0.0
        %992 = vmatprep.subr.mxu0 0.0
        %993 = vmatpush1.msra.mxu0 0.0
        %994 = vmatprep.subr.mxu0 0.0
        %995 = vmatpush1.msra.mxu0 0.0
        %996 = vmatprep.subr.mxu0 0.0
        %997 = vmatpush1.msra.mxu0 0.0
        %998 = vmatprep.subr.mxu0 0.0
        %999 = vmatpush1.msra.mxu0 0.0
        %1000 = vmatprep.subr.mxu0 0.0
        %1001 = vmatpush1.msra.mxu0 0.0
        %1002 = vmatprep.subr.mxu0 0.0
        %1003 = vmatpush1.msra.mxu0 0.0
        %1004 = vmatprep.subr.mxu0 0.0
        %1005 = vmatpush1.msra.mxu0 %v181
        %1006 = vmatprep.subr.mxu0 0.0
        %1007 = vmatpush1.msra.mxu0 %v180
        %1008 = vmatprep.subr.mxu0 0.0
        %1009 = vmatpush2.msra.mxu0 0.0
        %1010 = vmatprep.subr.mxu0 0.0
        %1011 = vmatpush2.msra.mxu0 0.0
        %1012 = vmatprep.subr.mxu0 0.0
        %1013 = vmatpush2.msra.mxu0 0.0
        %1014 = vmatprep.subr.mxu0 0.0
        %1015 = vmatpush2.msra.mxu0 0.0
        %1016 = vmatprep.subr.mxu0 0.0
        %1017 = vmatpush2.msra.mxu0 0.0
        %1018 = vmatprep.subr.mxu0 0.0
        %1019 = vmatpush2.msra.mxu0 0.0
        %1020 = vmatprep.subr.mxu0 0.0
        %1021 = vmatpush2.msra.mxu0 0.0
        %1022 = vmatprep.subr.mxu0 0.0
        %1023 = vmatpush2.msra.mxu0 0.0
        %1024 = vmatprep.subr.mxu0 0.0
        %1025 = vmatpush2.msra.mxu0 0.0
        %1026 = vmatprep.subr.mxu0 0.0
        %1027 = vmatpush2.msra.mxu0 0.0
        %1028 = vmatprep.subr.mxu0 0.0
        %1029 = vmatpush2.msra.mxu0 0.0
        %1030 = vmatprep.subr.mxu0 0.0
        %1031 = vmatpush2.msra.mxu0 0.0
        %1032 = vmatprep.subr.mxu0 0.0
        %1033 = vmatpush2.msra.mxu0 0.0
        %1034 = vmatprep.subr.mxu0 0.0
        %1035 = vmatpush2.msra.mxu0 0.0
        %1036 = vmatprep.subr.mxu0 0.0
        %1037 = vmatpush2.msra.mxu0 0.0
        %1038 = vmatprep.subr.mxu0 0.0
        %1039 = vmatpush2.msra.mxu0 0.0
        %1040 = vmatprep.mubr.f32.mxu0 0.0
        %1041 = vmatmul.mubr.f32.gmra.mxu0 %v974
        %v1042 = vpop.f32.mrf.mxu0
        %v1043 = vadd.f32 0.0, %v1042
        %v1044 = vpop.f32.mrf.mxu0
        %1045 = vdwg.mxu0
        %1046 = vmatprep.subr.mxu0 0.0
        %1047 = vmatpush1.msra.mxu0 0.0
        %1048 = vmatprep.subr.mxu0 0.0
        %1049 = vmatpush1.msra.mxu0 0.0
        %1050 = vmatprep.subr.mxu0 0.0
        %1051 = vmatpush1.msra.mxu0 0.0
        %1052 = vmatprep.subr.mxu0 0.0
        %1053 = vmatpush1.msra.mxu0 0.0
        %1054 = vmatprep.subr.mxu0 0.0
        %1055 = vmatpush1.msra.mxu0 0.0
        %1056 = vmatprep.subr.mxu0 0.0
        %1057 = vmatpush1.msra.mxu0 0.0
        %1058 = vmatprep.subr.mxu0 0.0
        %1059 = vmatpush1.msra.mxu0 0.0
        %1060 = vmatprep.subr.mxu0 0.0
        %1061 = vmatpush1.msra.mxu0 0.0
        %1062 = vmatprep.subr.mxu0 0.0
        %1063 = vmatpush1.msra.mxu0 0.0
        %1064 = vmatprep.subr.mxu0 0.0
        %1065 = vmatpush1.msra.mxu0 0.0
        %1066 = vmatprep.subr.mxu0 0.0
        %1067 = vmatpush1.msra.mxu0 0.0
        %1068 = vmatprep.subr.mxu0 0.0
        %1069 = vmatpush1.msra.mxu0 0.0
        %1070 = vmatprep.subr.mxu0 0.0
        %1071 = vmatpush1.msra.mxu0 %v179
        %1072 = vmatprep.subr.mxu0 0.0
        %1073 = vmatpush1.msra.mxu0 %v178
        %1074 = vmatprep.subr.mxu0 0.0
        %1075 = vmatpush1.msra.mxu0 %v177
        %1076 = vmatprep.subr.mxu0 0.0
        %1077 = vmatpush1.msra.mxu0 %v176
        %1078 = vmatprep.subr.mxu0 0.0
        %1079 = vmatpush2.msra.mxu0 0.0
        %1080 = vmatprep.subr.mxu0 0.0
        %1081 = vmatpush2.msra.mxu0 0.0
        %1082 = vmatprep.subr.mxu0 0.0
        %1083 = vmatpush2.msra.mxu0 0.0
        %1084 = vmatprep.subr.mxu0 0.0
        %1085 = vmatpush2.msra.mxu0 0.0
        %1086 = vmatprep.subr.mxu0 0.0
        %1087 = vmatpush2.msra.mxu0 0.0
        %1088 = vmatprep.subr.mxu0 0.0
        %1089 = vmatpush2.msra.mxu0 0.0
        %1090 = vmatprep.subr.mxu0 0.0
        %1091 = vmatpush2.msra.mxu0 0.0
        %1092 = vmatprep.subr.mxu0 0.0
        %1093 = vmatpush2.msra.mxu0 0.0
        %1094 = vmatprep.subr.mxu0 0.0
        %1095 = vmatpush2.msra.mxu0 0.0
        %1096 = vmatprep.subr.mxu0 0.0
        %1097 = vmatpush2.msra.mxu0 0.0
        %1098 = vmatprep.subr.mxu0 0.0
        %1099 = vmatpush2.msra.mxu0 0.0
        %1100 = vmatprep.subr.mxu0 0.0
        %1101 = vmatpush2.msra.mxu0 0.0
        %1102 = vmatprep.subr.mxu0 0.0
        %1103 = vmatpush2.msra.mxu0 0.0
        %1104 = vmatprep.subr.mxu0 0.0
        %1105 = vmatpush2.msra.mxu0 0.0
        %1106 = vmatprep.subr.mxu0 0.0
        %1107 = vmatpush2.msra.mxu0 0.0
        %1108 = vmatprep.subr.mxu0 0.0
        %1109 = vmatpush2.msra.mxu0 0.0
        %1110 = vmatprep.mubr.f32.mxu0 0.0
        %1111 = vmatmul.mubr.f32.gmra.mxu0 %v674
        %v1112 = vpop.f32.mrf.mxu0
        %v1113 = vadd.f32 %v568, %v1112
        %v1114 = vpop.f32.mrf.mxu0
        %1115 = vdwg.mxu0
        %v1116 = vadd.f32 %v1043, %v1113
        %v1117 = vxor.u32 %v1116, 2147483648
        %v1118 = vmul.f32 %v1117, 1.442695
        %v1119 = vpow.pop %v1118
        %v1120 = vadd.f32 %v1119, 1.0
        %v1121 = vrcp.pop %v1120
        %v1122 = vmul.f32 1.0, %v1121
        %1124 = vrot.lane.b32.xlu0 %v1113, 64
        %v1125 = vpop.permute.xlu0 %1124
        %v1127 = vmul.f32 %v1122, %v1125
        %1129 = vrot.lane.b32.xlu0 %v1127, 64
        %v1130 = vpop.permute.xlu0 %1129
        %v1132 = vadd.f32 %v1043, %v1130
        %v1133 = vtanh.pop %v1132
        %v1134 = vsub.f32 1.0, %v1122
        %1136 = vrot.lane.b32.xlu0 %v1133, 96
        %v1137 = vpop.permute.xlu0 %1136
        %v1139 = vmul.f32 %v1134, %v1137
        %v1140 = vmul.f32 %v1122, %v668
        %v1141 = vadd.f32 %v1139, %v1140
        %vm1142 = vcmp.lt.s32.totalorder %v486, 4
        %v1143 = vsub.s32 %v486, 3
        %v1144 = vsel %vm1142, 0, %v1143
        %vm1145 = vcmp.eq.s32.totalorder %v1144, 0
        %v1146 = vsel %vm1145, 1, 0
        %v1147 = vcvt.s32.f32 %v1146
        %v1148 = vld [vmem:[#allocation3 + $0x40] sm:$0xff]
        %v1149 = vld [vmem:[#allocation3 + $0x48] sm:$0xff]
        %v1150 = vld [vmem:[#allocation3 + $0x50] sm:$0xff]
        %v1151 = vld [vmem:[#allocation3 + $0x58] sm:$0xff]
        %v1152 = vlaneseq
        %v1153 = vshrl.u32 %v1152, 7
        %v1154 = vsub.s32 0, %v1153
        %v1155 = vrot.slane %v1147, %v1154
        %v1156 = vmul.f32 %v1155, %v1148
        %v1157 = vmul.f32 %v1155, %v1149
        %v1158 = vmul.f32 %v1155, %v1150
        %v1159 = vmul.f32 %v1155, %v1151
        %v1160 = vadd.f32 %v1156, 0.0
        %v1161 = vadd.f32 %v1157, 0.0
        %v1162 = vadd.f32 %v1158, 0.0
        %v1163 = vadd.f32 %v1159, 0.0
        %v1164 = vrot.slane %v182, 2
        %v1166 = vmul.f32 %v1147, %v1164
        %v1167 = vadd.f32 %v1166, 0.0
        %v1168 = vmul.f32 %v1147, 7.0
        %v1169 = vadd.f32 %v1168, 0.0
        %vm1170 = vcmp.eq.s32.totalorder %v1144, 1
        %v1171 = vsel %vm1170, 1, 0
        %v1172 = vcvt.s32.f32 %v1171
        %v1173 = vld [vmem:[#allocation3 + $0x60] sm:$0xff]
        %v1174 = vld [vmem:[#allocation3 + $0x68] sm:$0xff]
        %v1175 = vld [vmem:[#allocation3 + $0x70] sm:$0xff]
        %v1176 = vld [vmem:[#allocation3 + $0x78] sm:$0xff]
        %v1177 = vlaneseq
        %v1178 = vshrl.u32 %v1177, 7
        %v1179 = vsub.s32 0, %v1178
        %v1180 = vrot.slane %v1172, %v1179
        %v1181 = vmul.f32 %v1180, %v1173
        %v1182 = vmul.f32 %v1180, %v1174
        %v1183 = vmul.f32 %v1180, %v1175
        %v1184 = vmul.f32 %v1180, %v1176
        %v1185 = vadd.f32 %v1160, %v1181
        %v1186 = vadd.f32 %v1161, %v1182
        %v1187 = vadd.f32 %v1162, %v1183
        %v1188 = vadd.f32 %v1163, %v1184
        %v1189 = vrot.slane %v182, 3
        %v1191 = vmul.f32 %v1172, %v1189
        %v1192 = vadd.f32 %v1167, %v1191
        %v1193 = vmul.f32 %v1172, 4.0
        %v1194 = vadd.f32 %v1169, %v1193
        %vm1195 = vcmp.eq.s32.totalorder %v1144, 2
        %v1196 = vsel %vm1195, 1, 0
        %v1197 = vcvt.s32.f32 %v1196
        %v1198 = vld [vmem:[#allocation3 + $0x80] sm:$0xff]
        %v1199 = vld [vmem:[#allocation3 + $0x88] sm:$0xff]
        %v1200 = vld [vmem:[#allocation3 + $0x90] sm:$0xff]
        %v1201 = vld [vmem:[#allocation3 + $0x98] sm:$0xff]
        %v1202 = vlaneseq
        %v1203 = vshrl.u32 %v1202, 7
        %v1204 = vsub.s32 0, %v1203
        %v1205 = vrot.slane %v1197, %v1204
        %v1206 = vmul.f32 %v1205, %v1198
        %v1207 = vmul.f32 %v1205, %v1199
        %v1208 = vmul.f32 %v1205, %v1200
        %v1209 = vmul.f32 %v1205, %v1201
        %v1210 = vadd.f32 %v1185, %v1206
        %v1211 = vadd.f32 %v1186, %v1207
        %v1212 = vadd.f32 %v1187, %v1208
        %v1213 = vadd.f32 %v1188, %v1209
        %v1214 = vrot.slane %v182, 4
        %v1216 = vmul.f32 %v1197, %v1214
        %v1217 = vadd.f32 %v1192, %v1216
        %v1218 = vmul.f32 %v1197, 2.0
        %v1219 = vadd.f32 %v1194, %v1218
        %vm1220 = vcmp.eq.s32.totalorder %v1144, 3
        %v1221 = vsel %vm1220, 1, 0
        %v1222 = vcvt.s32.f32 %v1221
        %v1223 = vld [vmem:[#allocation3 + $0xa0] sm:$0xff]
        %v1224 = vld [vmem:[#allocation3 + $0xa8] sm:$0xff]
        %v1225 = vld [vmem:[#allocation3 + $0xb0] sm:$0xff]
        %v1226 = vld [vmem:[#allocation3 + $0xb8] sm:$0xff]
        %v1227 = vlaneseq
        %v1228 = vshrl.u32 %v1227, 7
        %v1229 = vsub.s32 0, %v1228
        %v1230 = vrot.slane %v1222, %v1229
        %v1231 = vmul.f32 %v1230, %v1223
        %v1232 = vmul.f32 %v1230, %v1224
        %v1233 = vmul.f32 %v1230, %v1225
        %v1234 = vmul.f32 %v1230, %v1226
        %v1235 = vadd.f32 %v1210, %v1231
        %v1236 = vadd.f32 %v1211, %v1232
        %v1237 = vadd.f32 %v1212, %v1233
        %v1238 = vadd.f32 %v1213, %v1234
        %v1239 = vrot.slane %v182, 5
        %v1241 = vmul.f32 %v1222, %v1239
        %v1242 = vadd.f32 %v1217, %v1241
        %v1243 = vmul.f32 %v1222, 2.0
        %v1244 = vadd.f32 %v1219, %v1243
        %vm1245 = vcmp.eq.s32.totalorder %v1144, 4
        %v1246 = vsel %vm1245, 1, 0
        %v1247 = vcvt.s32.f32 %v1246
        %v1248 = vld [vmem:[#allocation3 + $0xc0] sm:$0xff]
        %v1249 = vld [vmem:[#allocation3 + $0xc8] sm:$0xff]
        %v1250 = vld [vmem:[#allocation3 + $0xd0] sm:$0xff]
        %v1251 = vld [vmem:[#allocation3 + $0xd8] sm:$0xff]
        %v1252 = vlaneseq
        %v1253 = vshrl.u32 %v1252, 7
        %v1254 = vsub.s32 0, %v1253
        %v1255 = vrot.slane %v1247, %v1254
        %v1256 = vmul.f32 %v1255, %v1248
        %v1257 = vmul.f32 %v1255, %v1249
        %v1258 = vmul.f32 %v1255, %v1250
        %v1259 = vmul.f32 %v1255, %v1251
        %v1260 = vadd.f32 %v1235, %v1256
        %v1261 = vadd.f32 %v1236, %v1257
        %v1262 = vadd.f32 %v1237, %v1258
        %v1263 = vadd.f32 %v1238, %v1259
        %v1264 = vrot.slane %v182, 6
        %v1266 = vmul.f32 %v1247, %v1264
        %v1267 = vadd.f32 %v1242, %v1266
        %v1268 = vmul.f32 %v1247, 3.0
        %v1269 = vadd.f32 %v1244, %v1268
        %1271 = vrot.lane.b32.xlu0 %v1141, 96
        %v1272 = vpop.permute.xlu0 %1271
        %v1273 = vsel %vm183, %v1272, 0
        %1275 = vmatprep.subr.mxu0 0.0
        %1276 = vmatpush1.msra.mxu0 0.0
        %1277 = vmatprep.subr.mxu0 0.0
        %1278 = vmatpush1.msra.mxu0 0.0
        %1279 = vmatprep.subr.mxu0 0.0
        %1280 = vmatpush1.msra.mxu0 0.0
        %1281 = vmatprep.subr.mxu0 0.0
        %1282 = vmatpush1.msra.mxu0 0.0
        %1283 = vmatprep.subr.mxu0 0.0
        %1284 = vmatpush1.msra.mxu0 0.0
        %1285 = vmatprep.subr.mxu0 0.0
        %1286 = vmatpush1.msra.mxu0 0.0
        %1287 = vmatprep.subr.mxu0 0.0
        %1288 = vmatpush1.msra.mxu0 0.0
        %1289 = vmatprep.subr.mxu0 0.0
        %1290 = vmatpush1.msra.mxu0 0.0
        %1291 = vmatprep.subr.mxu0 0.0
        %1292 = vmatpush1.msra.mxu0 0.0
        %1293 = vmatprep.subr.mxu0 0.0
        %1294 = vmatpush1.msra.mxu0 0.0
        %1295 = vmatprep.subr.mxu0 0.0
        %1296 = vmatpush1.msra.mxu0 0.0
        %1297 = vmatprep.subr.mxu0 0.0
        %1298 = vmatpush1.msra.mxu0 0.0
        %1299 = vmatprep.subr.mxu0 0.0
        %1300 = vmatpush1.msra.mxu0 %v1263
        %1301 = vmatprep.subr.mxu0 0.0
        %1302 = vmatpush1.msra.mxu0 %v1262
        %1303 = vmatprep.subr.mxu0 0.0
        %1304 = vmatpush1.msra.mxu0 %v1261
        %1305 = vmatprep.subr.mxu0 0.0
        %1306 = vmatpush1.msra.mxu0 %v1260
        %1307 = vmatprep.subr.mxu0 0.0
        %1308 = vmatpush2.msra.mxu0 0.0
        %1309 = vmatprep.subr.mxu0 0.0
        %1310 = vmatpush2.msra.mxu0 0.0
        %1311 = vmatprep.subr.mxu0 0.0
        %1312 = vmatpush2.msra.mxu0 0.0
        %1313 = vmatprep.subr.mxu0 0.0
        %1314 = vmatpush2.msra.mxu0 0.0
        %1315 = vmatprep.subr.mxu0 0.0
        %1316 = vmatpush2.msra.mxu0 0.0
        %1317 = vmatprep.subr.mxu0 0.0
        %1318 = vmatpush2.msra.mxu0 0.0
        %1319 = vmatprep.subr.mxu0 0.0
        %1320 = vmatpush2.msra.mxu0 0.0
        %1321 = vmatprep.subr.mxu0 0.0
        %1322 = vmatpush2.msra.mxu0 0.0
        %1323 = vmatprep.subr.mxu0 0.0
        %1324 = vmatpush2.msra.mxu0 0.0
        %1325 = vmatprep.subr.mxu0 0.0
        %1326 = vmatpush2.msra.mxu0 0.0
        %1327 = vmatprep.subr.mxu0 0.0
        %1328 = vmatpush2.msra.mxu0 0.0
        %1329 = vmatprep.subr.mxu0 0.0
        %1330 = vmatpush2.msra.mxu0 0.0
        %1331 = vmatprep.subr.mxu0 0.0
        %1332 = vmatpush2.msra.mxu0 0.0
        %1333 = vmatprep.subr.mxu0 0.0
        %1334 = vmatpush2.msra.mxu0 0.0
        %1335 = vmatprep.subr.mxu0 0.0
        %1336 = vmatpush2.msra.mxu0 0.0
        %1337 = vmatprep.subr.mxu0 0.0
        %1338 = vmatpush2.msra.mxu0 0.0
        %1339 = vmatprep.mubr.f32.mxu0 0.0
        %1340 = vmatmul.mubr.f32.gmra.mxu0 %v1273
        %v1341 = vpop.f32.mrf.mxu0
        %v1342 = vadd.f32 %v1267, %v1341
        %v1343 = vpop.f32.mrf.mxu0
        %1344 = vdwg.mxu0
        %v1345 = vmax.f32 %v1342, 0.0
        %1350 = vrot.lane.b32.xlu0 %v1260, 96
        %v1351 = vpop.permute.xlu0 %1350
        %1352 = vrot.lane.b32.xlu0 %v1261, 96
        %v1353 = vpop.permute.xlu0 %1352
        %1354 = vrot.lane.b32.xlu0 %v1262, 96
        %v1355 = vpop.permute.xlu0 %1354
        %1356 = vrot.lane.b32.xlu0 %v1263, 96
        %v1357 = vpop.permute.xlu0 %1356
        %1363 = vrot.lane.b32.xlu0 %v1267, 96
        %v1364 = vpop.permute.xlu0 %1363
        %v1367 = vsel %vm183, %v1345, 0
        %1369 = vmatprep.subr.mxu0 0.0
        %1370 = vmatpush1.msra.mxu0 0.0
        %1371 = vmatprep.subr.mxu0 0.0
        %1372 = vmatpush1.msra.mxu0 0.0
        %1373 = vmatprep.subr.mxu0 0.0
        %1374 = vmatpush1.msra.mxu0 0.0
        %1375 = vmatprep.subr.mxu0 0.0
        %1376 = vmatpush1.msra.mxu0 0.0
        %1377 = vmatprep.subr.mxu0 0.0
        %1378 = vmatpush1.msra.mxu0 0.0
        %1379 = vmatprep.subr.mxu0 0.0
        %1380 = vmatpush1.msra.mxu0 0.0
        %1381 = vmatprep.subr.mxu0 0.0
        %1382 = vmatpush1.msra.mxu0 0.0
        %1383 = vmatprep.subr.mxu0 0.0
        %1384 = vmatpush1.msra.mxu0 0.0
        %1385 = vmatprep.subr.mxu0 0.0
        %1386 = vmatpush1.msra.mxu0 0.0
        %1387 = vmatprep.subr.mxu0 0.0
        %1388 = vmatpush1.msra.mxu0 0.0
        %1389 = vmatprep.subr.mxu0 0.0
        %1390 = vmatpush1.msra.mxu0 0.0
        %1391 = vmatprep.subr.mxu0 0.0
        %1392 = vmatpush1.msra.mxu0 0.0
        %1393 = vmatprep.subr.mxu0 0.0
        %1394 = vmatpush1.msra.mxu0 %v1357
        %1395 = vmatprep.subr.mxu0 0.0
        %1396 = vmatpush1.msra.mxu0 %v1355
        %1397 = vmatprep.subr.mxu0 0.0
        %1398 = vmatpush1.msra.mxu0 %v1353
        %1399 = vmatprep.subr.mxu0 0.0
        %1400 = vmatpush1.msra.mxu0 %v1351
        %1401 = vmatprep.subr.mxu0 0.0
        %1402 = vmatpush2.msra.mxu0 0.0
        %1403 = vmatprep.subr.mxu0 0.0
        %1404 = vmatpush2.msra.mxu0 0.0
        %1405 = vmatprep.subr.mxu0 0.0
        %1406 = vmatpush2.msra.mxu0 0.0
        %1407 = vmatprep.subr.mxu0 0.0
        %1408 = vmatpush2.msra.mxu0 0.0
        %1409 = vmatprep.subr.mxu0 0.0
        %1410 = vmatpush2.msra.mxu0 0.0
        %1411 = vmatprep.subr.mxu0 0.0
        %1412 = vmatpush2.msra.mxu0 0.0
        %1413 = vmatprep.subr.mxu0 0.0
        %1414 = vmatpush2.msra.mxu0 0.0
        %1415 = vmatprep.subr.mxu0 0.0
        %1416 = vmatpush2.msra.mxu0 0.0
        %1417 = vmatprep.subr.mxu0 0.0
        %1418 = vmatpush2.msra.mxu0 0.0
        %1419 = vmatprep.subr.mxu0 0.0
        %1420 = vmatpush2.msra.mxu0 0.0
        %1421 = vmatprep.subr.mxu0 0.0
        %1422 = vmatpush2.msra.mxu0 0.0
        %1423 = vmatprep.subr.mxu0 0.0
        %1424 = vmatpush2.msra.mxu0 0.0
        %1425 = vmatprep.subr.mxu0 0.0
        %1426 = vmatpush2.msra.mxu0 0.0
        %1427 = vmatprep.subr.mxu0 0.0
        %1428 = vmatpush2.msra.mxu0 0.0
        %1429 = vmatprep.subr.mxu0 0.0
        %1430 = vmatpush2.msra.mxu0 0.0
        %1431 = vmatprep.subr.mxu0 0.0
        %1432 = vmatpush2.msra.mxu0 0.0
        %1433 = vmatprep.mubr.f32.mxu0 0.0
        %1434 = vmatmul.mubr.f32.gmra.mxu0 %v1367
        %v1435 = vpop.f32.mrf.mxu0
        %v1436 = vadd.f32 %v1364, %v1435
        %v1437 = vpop.f32.mrf.mxu0
        %1438 = vdwg.mxu0
        %v1439 = vmax.f32 %v1436, 0.0
        %1440 = vrot.lane.b32.xlu0 %v1260, 64
        %v1441 = vpop.permute.xlu0 %1440
        %1442 = vrot.lane.b32.xlu0 %v1261, 64
        %v1443 = vpop.permute.xlu0 %1442
        %1444 = vrot.lane.b32.xlu0 %v1262, 64
        %v1445 = vpop.permute.xlu0 %1444
        %1446 = vrot.lane.b32.xlu0 %v1263, 64
        %v1447 = vpop.permute.xlu0 %1446
        %1452 = vrot.lane.b32.xlu0 %v1267, 64
        %v1453 = vpop.permute.xlu0 %1452
        %v1456 = vsel %vm183, %v1439, 0
        %1458 = vmatprep.subr.mxu0 0.0
        %1459 = vmatpush1.msra.mxu0 0.0
        %1460 = vmatprep.subr.mxu0 0.0
        %1461 = vmatpush1.msra.mxu0 0.0
        %1462 = vmatprep.subr.mxu0 0.0
        %1463 = vmatpush1.msra.mxu0 0.0
        %1464 = vmatprep.subr.mxu0 0.0
        %1465 = vmatpush1.msra.mxu0 0.0
        %1466 = vmatprep.subr.mxu0 0.0
        %1467 = vmatpush1.msra.mxu0 0.0
        %1468 = vmatprep.subr.mxu0 0.0
        %1469 = vmatpush1.msra.mxu0 0.0
        %1470 = vmatprep.subr.mxu0 0.0
        %1471 = vmatpush1.msra.mxu0 0.0
        %1472 = vmatprep.subr.mxu0 0.0
        %1473 = vmatpush1.msra.mxu0 0.0
        %1474 = vmatprep.subr.mxu0 0.0
        %1475 = vmatpush1.msra.mxu0 0.0
        %1476 = vmatprep.subr.mxu0 0.0
        %1477 = vmatpush1.msra.mxu0 0.0
        %1478 = vmatprep.subr.mxu0 0.0
        %1479 = vmatpush1.msra.mxu0 0.0
        %1480 = vmatprep.subr.mxu0 0.0
        %1481 = vmatpush1.msra.mxu0 0.0
        %1482 = vmatprep.subr.mxu0 0.0
        %1483 = vmatpush1.msra.mxu0 %v1447
        %1484 = vmatprep.subr.mxu0 0.0
        %1485 = vmatpush1.msra.mxu0 %v1445
        %1486 = vmatprep.subr.mxu0 0.0
        %1487 = vmatpush1.msra.mxu0 %v1443
        %1488 = vmatprep.subr.mxu0 0.0
        %1489 = vmatpush1.msra.mxu0 %v1441
        %1490 = vmatprep.subr.mxu0 0.0
        %1491 = vmatpush2.msra.mxu0 0.0
        %1492 = vmatprep.subr.mxu0 0.0
        %1493 = vmatpush2.msra.mxu0 0.0
        %1494 = vmatprep.subr.mxu0 0.0
        %1495 = vmatpush2.msra.mxu0 0.0
        %1496 = vmatprep.subr.mxu0 0.0
        %1497 = vmatpush2.msra.mxu0 0.0
        %1498 = vmatprep.subr.mxu0 0.0
        %1499 = vmatpush2.msra.mxu0 0.0
        %1500 = vmatprep.subr.mxu0 0.0
        %1501 = vmatpush2.msra.mxu0 0.0
        %1502 = vmatprep.subr.mxu0 0.0
        %1503 = vmatpush2.msra.mxu0 0.0
        %1504 = vmatprep.subr.mxu0 0.0
        %1505 = vmatpush2.msra.mxu0 0.0
        %1506 = vmatprep.subr.mxu0 0.0
        %1507 = vmatpush2.msra.mxu0 0.0
        %1508 = vmatprep.subr.mxu0 0.0
        %1509 = vmatpush2.msra.mxu0 0.0
        %1510 = vmatprep.subr.mxu0 0.0
        %1511 = vmatpush2.msra.mxu0 0.0
        %1512 = vmatprep.subr.mxu0 0.0
        %1513 = vmatpush2.msra.mxu0 0.0
        %1514 = vmatprep.subr.mxu0 0.0
        %1515 = vmatpush2.msra.mxu0 0.0
        %1516 = vmatprep.subr.mxu0 0.0
        %1517 = vmatpush2.msra.mxu0 0.0
        %1518 = vmatprep.subr.mxu0 0.0
        %1519 = vmatpush2.msra.mxu0 0.0
        %1520 = vmatprep.subr.mxu0 0.0
        %1521 = vmatpush2.msra.mxu0 0.0
        %1522 = vmatprep.mubr.f32.mxu0 0.0
        %1523 = vmatmul.mubr.f32.gmra.mxu0 %v1456
        %v1524 = vpop.f32.mrf.mxu0
        %v1525 = vadd.f32 %v1453, %v1524
        %v1526 = vpop.f32.mrf.mxu0
        %1527 = vdwg.mxu0
        %vm1528 = vcmp.lt.f32.partialorder %v442, %v1269
        %v1529 = vsel %vm1528, %v1525, -1e+30
        %v1530 = vsel %vm445, %v1529, -inf
        %1531 = vmax.xlane.f32.xlu0 %v1530
        %v1532 = vpop.xlane.xlu0 %1531
        %v1533 = vsub.f32 %v1529, %v1532
        %v1534 = vmul.f32 %v1533, 1.442695
        %v1535 = vpow.pop %v1534
        %v1536 = vsel %vm1528, %v1535, 0.0
        %v1537 = vsel %vm445, %v1536, 0.0
        %1538 = vadd.xlane.f32.xlu0 %v1537
        %v1539 = vpop.xlane.xlu0 %1538
        %v1540 = vrcp.pop %v1539
        %v1541 = vmul.f32 %v1536, %v1540
        %v1542 = vmul.f32 %v1541, %v459
        %v1543 = vstv %s165
        %v1544 = vrcp.pop %v1269
        %v1545 = vmul.f32 %v1543, %v1544
        %v1546 = vadd.f32 %v1542, %v1545
        %v1547 = vsel %vm1528, %v1546, 0.0
        %v1548 = vsel %vm445, %v1547, -inf
        %1549 = vmax.xlane.f32.xlu0 %v1548
        %v1550 = vpop.xlane.xlu0 %1549
        %vm1551 = vcmp.ge.f32.partialorder %v1547, %v1550
        %v1552 = vsel %vm1551, %v441, 32
        %v1553 = vsel %vm445, %v1552, 2147483647
        %v1554 = vand.u32 %v1553, 65535
        %v1555 = vshra.s32 %v1553, 16
        %v1556 = vcvt.s32.f32 %v1554
        %v1557 = vcvt.s32.f32 %v1555
        %1558 = vmin.xlane.f32.xlu0 %v1557
        %v1559 = vpop.xlane.xlu0 %1558
        %vm1560 = vcmp.eq.f32.partialorder %v1557, %v1559
        %v1561 = vsel %vm1560, %v1556, inf
        %1562 = vmin.xlane.f32.xlu0 %v1561
        %v1563 = vpop.xlane.xlu0 %1562
        %v1564 = vcvt.f32.s32 %v1563
        %v1565 = vcvt.f32.s32 %v1559
        %v1566 = vshll.u32 %v1565, 16
        %v1567 = vadd.s32 %v1566, %v1564
        %vm1568 = vcmp.eq.s32.totalorder %v441, %v1567
        %v1569 = vsel %vm1568, %v1547, 0.0
        %v1570 = vsel %vm445, %v1569, 0.0
        %1571 = vadd.xlane.f32.xlu0 %v1570
        %v1572 = vpop.xlane.xlu0 %1571
        %v1573 = vmul.f32 %v491, %v968
        %v1574 = vmul.f32 %v1573, %v1572
        %v1575 = vlaneseq
        %v1576 = vshrl.u32 %v1575, 7
        %vm1577 = vcmp.eq.s32.totalorder %v441, 0
        %v1578 = vcvt.s32.f32 %v486
        %v1579 = vlaneseq
        %v1580 = vshrl.u32 %v1579, 7
        %v1581 = vsub.s32 0, %v1580
        %v1582 = vrot.slane %v1578, %v1581
        %v1583 = vsel %vm1577, %v1582, 0.0
        %vm1584 = vcmp.eq.s32.totalorder %v441, 1
        %v1585 = vcvt.s32.f32 %v963
        %v1586 = vlaneseq
        %v1587 = vshrl.u32 %v1586, 7
        %v1588 = vsub.s32 0, %v1587
        %v1589 = vrot.slane %v1585, %v1588
        %v1590 = vsel %vm1584, %v1589, 0.0
        %v1591 = vadd.f32 %v1583, %v1590
        %vm1592 = vcmp.eq.s32.totalorder %v441, 2
        %v1593 = vcvt.s32.f32 %v1567
        %v1594 = vlaneseq
        %v1595 = vshrl.u32 %v1594, 7
        %v1596 = vsub.s32 0, %v1595
        %v1597 = vrot.slane %v1593, %v1596
        %v1598 = vsel %vm1592, %v1597, 0.0
        %v1599 = vadd.f32 %v1591, %v1598
        %vm1600 = vcmp.eq.s32.totalorder %v1576, 0
        %vm1601 = vcmp.eq.s32.totalorder %v1576, 1
        %v1602 = vsel %vm1601, %v1599, 0.0
        %v1603 = vlaneseq
        %v1604 = vshrl.u32 %v1603, 7
        %v1605 = vsub.s32 0, %v1604
        %v1606 = vrot.slane %v1574, %v1605
        %v1607 = vsel %vm1600, %v1606, %v1602
        %1608 = vst [vmem:[%s164] sm:$0xff] %v1607
        %s1609 = sand.u32 %s90, 1
        %s1610 = scalar_lea.sflag [#allocation5], %s1609
        %s1611 = sand.u32 %s90, 1
        %s1612 = smul.addr %s1611, 8
        %s1613 = scalar_lea.vmem [#allocation6], %s1612
        // Predicated region
        $region37: #{tpu_custom_call.1} parent=31 // pred_check
          %p1614 = pneg %p100
        $region38: #{tpu_custom_call.1} parent=31 // pred_check_branch
          %1616 = sbr.rel (%p1614) target = $region40
        $region39: #{tpu_custom_call.1} parent=31 // pred_region
          %s1618 = ssub.s32 128, 128
          %1619 = vsyncadd %s1610, %s1618
          %s1620 = smul.addr %s19, 128
          %s1621 = scalar_lea.hbm %s3, %s1620
          %s1623 = sshll.u32 %s1613, 4
          %s1624 = int_to_ptr.vmem [resolvable:$true] %s1623
          %1626 = dma.vmem_to_hbm [thread:$0]  %s1624, 128, %s1621, %s1610
        $region40: #{tpu_custom_call.1} parent=31 // pred_fallthru
          _
      $region32: #{tpu_custom_call.1} parent=5 // pred_fallthru
        _
      %p1627 = scmp.le.s32.totalorder 2, %s14
      // Predicated region
      $region41: #{tpu_custom_call.1} parent=5 // pred_check
        %p1628 = pneg %p1627
      $region42: #{tpu_custom_call.1} parent=5 // pred_check_branch
        %1630 = sbr.rel (%p1628) target = $region44
      $region43: #{tpu_custom_call.1} parent=5 // pred_region
        %s1631 = ssub.s32 %s14, 2
        // Predicated region
        $region45: #{tpu_custom_call.1} parent=43 // pred_check
          %p1632 = pneg %p106
        $region46: #{tpu_custom_call.1} parent=43 // pred_check_branch
          %1634 = sbr.rel (%p1632) target = $region48
        $region47: #{tpu_custom_call.1} parent=43 // pred_region
          %s1635 = sand.u32 %s91, 1
          %s1636 = scalar_lea.sflag [#allocation5], %s1635
          %s1637 = sand.u32 %s91, 1
          %s1638 = smul.addr %s1637, 8
          %s1639 = scalar_lea.vmem [#allocation6], %s1638
          %1640 = dma.done %s1636, 128
        $region48: #{tpu_custom_call.1} parent=43 // pred_fallthru
          _
      $region44: #{tpu_custom_call.1} parent=5 // pred_fallthru
        _
    $region6: #{tpu_custom_call.1} parent=1 // loop_footer
      %s18 = sadd.s32 1, %s14
    $region7: #{tpu_custom_call.1} parent=1 // loop_footer_branch
      %13 = sbr.rel target = $region3
    $region8: #{tpu_custom_call.1} parent=1 // loop_exit
      _
    %1641 = vsyncpa [#allocation4], 1
    %s1642 = scalar_lea.sflag [#allocation4], 1
    %1643 = vsyncpa %s1642, 1
    %1644 = vsyncpa [#allocation5], 1
    %s1645 = scalar_lea.sflag [#allocation5], 1
    %1646 = vsyncpa %s1645, 1

</llo_original>
